<compile_context>
chip_gen: v5e
topology: v5e:2x2
jax: 0.10.0
libtpu: 0.0.40
codegen_flags: <defaults>
</compile_context>

<pallas_src>
import jax
import jax.numpy as jnp
from jax import lax
from jax.experimental import pallas as pl
from jax.experimental.pallas import tpu as pltpu

_LANE = 128


# --------------------------------------------------------------------------- helpers


def _round_up(v, m):
    return (v + m - 1) // m * m


def _vmem_capacity_bytes():
    """Architecture-aware VMEM capacity; conservative fallback if the query fails."""
    try:
        cap = int(pltpu.get_tpu_info().vmem_capacity_bytes)
        if cap > 0:
            return cap
    except Exception:
        pass
    return 64 * 1024 * 1024   # v7x per-TensorCore VMEM (safe lower bound)


def _fit_tile_rows(n, budget, resident_bytes, per_row_bytes, cap_rows):
    """Largest 128-multiple row tile whose estimated pass VMEM fits `budget`."""
    cap_rows = max(_LANE, min(_round_up(cap_rows, _LANE), _round_up(n, _LANE)))
    tm = cap_rows
    while tm >= _LANE:
        np_ = _round_up(n, tm)
        if resident_bytes(np_) + tm * per_row_bytes(np_) <= budget:
            return tm
        tm -= _LANE
    # TODO(synk): flash-style column tiling of the softmax would remove this limit.
    raise ValueError("AnomalyDAE attention row tile does not fit VMEM even at the "
                     "128-row floor; graph is too large for this chip.")


# --------------------------------------------------------------------------- kernels


def _attention_kernel(adj_ref, f1_ref, f2_ref, wh_ref, t2_ref, emb_ref, con_att_ref):
    f32 = jnp.float32
    # e[i, j] = leakyrelu(f1_i + f2_j), masked to -9e15 where adj == 0
    e = f1_ref[...] + f2_ref[...]                                   # (TM, Np)
    e = jnp.where(e > 0, e, 0.2 * e)                                # LeakyReLU(0.2)
    e = jnp.where(adj_ref[...] != 0, e, -9e15)                      # int8 adjacency mask

    # row softmax with EUP approximate reciprocal
    m = jnp.max(e, axis=1, keepdims=True)
    p = jnp.exp(e - m)
    denom = jnp.sum(p, axis=1, keepdims=True)
    att = p * pl.reciprocal(denom, approx=True)                     # (TM, Np)

    # h' = att @ Wh : the O(N^2*D) FLOP term -> bf16 operands, f32 accumulation
    h = jnp.dot(att.astype(jnp.bfloat16), wh_ref[...],
                preferred_element_type=f32)                         # (TM, Dp)
    emb = jnp.where(h > 0, h, jnp.exp(h) - 1.0)                     # ELU
    emb_ref[...] = emb.astype(emb_ref.dtype)                        # bf16 for Pass 3
    # con_att tile = emb @ t2^T  (contract dim 1 of both operands, no .T)
    con_att_ref[...] = lax.dot_general(emb, t2_ref[...],
                                       (((1,), (1,)), ((), ())),
                                       preferred_element_type=f32)


def _struct_recon_kernel(emb_tile_ref, emb_full_ref, con_adj_ref):
    # con_adj tile = emb_tile @ emb^T  -- bf16 operands, f32 accumulation
    con_adj_ref[...] = lax.dot_general(emb_tile_ref[...], emb_full_ref[...],
                                       (((1,), (1,)), ((), ())),
                                       preferred_element_type=jnp.float32)


# --------------------------------------------------------------------------- wrapper


def anomaly_dae_forward(x, adj, params, *, tile_rows=None):
    f32, bf16 = jnp.float32, jnp.bfloat16
    N, D = x.shape
    H = params["wf"].shape[1]
    Dp = _round_up(D, _LANE)
    Hp = _round_up(H, _LANE)

    vmem_limit = int(_vmem_capacity_bytes() * 0.9)
    budget = int(vmem_limit * 0.8)     # headroom for compiler-internal scratch

    # ---- Pass-2 VMEM model used to auto-size the attention row tile ----
    def p2_resident(np_):
        # full-resident arrays (double-buffered by the pipeline): Wh (bf16), f2, t2
        return 2 * (np_ * Dp * 2 + np_ * 4 + Dp * Dp * 4)

    def p2_per_row(np_):
        # adj int8 (x2 buffers), f1 (x2), emb bf16 + con_att f32 outputs (x2),
        # ~4 live f32 (1, np_) softmax temporaries (e / p / att / slack)
        return 2 * np_ + 8 + 2 * Dp * (2 + 4) + 4 * np_ * 4

    if tile_rows is None:
        TM = _fit_tile_rows(N, budget, p2_resident, p2_per_row, cap_rows=1024)
    else:
        TM = min(max(_LANE, _round_up(tile_rows, _LANE)), _round_up(N, _LANE))
    Np = _round_up(N, TM)
    n_tiles = Np // TM

    # ---- Pass-3 tile: multiple of TM dividing Np; it can afford more rows since
    #      only emb_full (bf16) + one (TM3, Np) output panel are live ----
    p3_resident = 2 * Np * Dp * 2
    p3_per_row = 2 * Dp * 2 + 3 * Np * 4
    d = int(max(1, min(n_tiles, 2048 // TM,
                       (budget - p3_resident) // max(TM * p3_per_row, 1))))
    while n_tiles % d:
        d -= 1
    TM3 = d * TM
    n_tiles3 = Np // TM3

    def pad2(a, r, c):
        return jnp.zeros((r, c), f32).at[:a.shape[0], :a.shape[1]].set(a.astype(f32))

    xp = pad2(x, Np, Dp)
    wf = pad2(params["wf"], Dp, Hp)
    bf_ = pad2(params["bf"], 1, Hp)
    wg = pad2(params["wg"], Hp, Dp)
    a1 = pad2(params["a1"], 1, Dp)
    a2 = pad2(params["a2"], 1, Dp)
    w1 = pad2(params["w1"], Np, Hp)
    b1 = pad2(params["b1"], 1, Hp)
    w2 = pad2(params["w2"], Hp, Dp)
    b2 = pad2(params["b2"], 1, Dp)

    # int8 adjacency: 4x smaller HBM read than an f32 additive mask; zero padding
    # also masks the padded columns for free.
    adj_i8 = jnp.zeros((Np, Np), jnp.int8).at[:N, :N].set((adj > 0).astype(jnp.int8))

    row_tile = lambda i: (i, 0)
    full_blk = lambda i: (0, 0)
    seq_params = pltpu.CompilerParams(dimension_semantics=("arbitrary",),
                                      vmem_limit_bytes=vmem_limit)
    par_params = pltpu.CompilerParams(dimension_semantics=("parallel",),
                                      vmem_limit_bytes=vmem_limit)

    # ------------------------------------------------------------------ Pass 1
    def _prep_kernel(x_ref, wf_ref, bfb_ref, wg_ref, a1_ref, a2_ref,
                     w1_ref, b1_ref, w2_ref, b2_ref,
                     wh_ref, f1_ref, f2_ref, t2_ref, t1_acc):
        i = pl.program_id(0)

        @pl.when(i == 0)
        def _():
            t1_acc[...] = jnp.zeros_like(t1_acc)

        xt = x_ref[...]                                                  # (TM, Dp)
        structure = jnp.dot(xt, wf_ref[...], preferred_element_type=f32) + bfb_ref[...]
        structure = jnp.maximum(structure, 0.0)                          # (TM, Hp)
        wh = jnp.dot(structure, wg_ref[...], preferred_element_type=f32)  # (TM, Dp)

        # zero padded node rows (relu(bf) @ Wg is non-zero there otherwise)
        row = i * TM + lax.broadcasted_iota(jnp.int32, (TM, 1), 0)
        wh = jnp.where(row < N, wh, 0.0)

        wh_ref[...] = wh.astype(wh_ref.dtype)                            # bf16
        f1_ref[...] = lax.dot_general(wh, a1_ref[...], (((1,), (1,)), ((), ())),
                                      preferred_element_type=f32)        # (TM, 1)
        f2_ref[...] = lax.dot_general(a2_ref[...], wh, (((1,), (1,)), ((), ())),
                                      preferred_element_type=f32)        # (1, TM)

        # x^T @ W1 partial sum, contracting the node axis of both (no transpose)
        t1_acc[...] += lax.dot_general(xt, w1_ref[...], (((0,), (0,)), ((), ())),
                                       preferred_element_type=f32)       # (Dp, Hp)

        @pl.when(i == pl.num_programs(0) - 1)
        def _():
            t1 = jnp.maximum(t1_acc[...] + b1_ref[...], 0.0)
            t2 = jnp.dot(t1, w2_ref[...], preferred_element_type=f32) + b2_ref[...]
            t2_ref[...] = jnp.maximum(t2, 0.0)                           # (Dp, Dp)

    wh, f1, f2, t2 = pl.pallas_call(
        _prep_kernel,
        out_shape=(jax.ShapeDtypeStruct((Np, Dp), bf16),
                   jax.ShapeDtypeStruct((Np, 1), f32),
                   jax.ShapeDtypeStruct((1, Np), f32),
                   jax.ShapeDtypeStruct((Dp, Dp), f32)),
        grid=(n_tiles,),
        in_specs=[
            pl.BlockSpec((TM, Dp), row_tile),    # x row tile
            pl.BlockSpec((Dp, Hp), full_blk),    # Wf
            pl.BlockSpec((1, Hp), full_blk),     # bf
            pl.BlockSpec((Hp, Dp), full_blk),    # Wg
            pl.BlockSpec((1, Dp), full_blk),     # a1
            pl.BlockSpec((1, Dp), full_blk),     # a2
            pl.BlockSpec((TM, Hp), row_tile),    # W1 row tile (node-major)
            pl.BlockSpec((1, Hp), full_blk),     # b1
            pl.BlockSpec((Hp, Dp), full_blk),    # W2
            pl.BlockSpec((1, Dp), full_blk),     # b2
        ],
        out_specs=(pl.BlockSpec((TM, Dp), row_tile),        # Wh (bf16)
                   pl.BlockSpec((TM, 1), row_tile),         # f1 = Wh @ a1^T
                   pl.BlockSpec((1, TM), lambda i: (0, i)),  # f2 = a2 @ Wh^T
                   pl.BlockSpec((Dp, Dp), full_blk)),        # t2
        scratch_shapes=[pltpu.VMEM((Dp, Hp), f32)],
        compiler_params=seq_params,
    )(xp, wf, bf_, wg, a1, a2, w1, b1, w2, b2)

    # ------------------------------------------------------------------ Pass 2
    emb, con_att_p = pl.pallas_call(
        _attention_kernel,
        out_shape=(jax.ShapeDtypeStruct((Np, Dp), bf16),
                   jax.ShapeDtypeStruct((Np, Dp), f32)),
        grid=(n_tiles,),
        in_specs=[
            pl.BlockSpec((TM, Np), row_tile),    # adjacency row panel (int8)
            pl.BlockSpec((TM, 1), row_tile),     # f1 row tile
            pl.BlockSpec((1, Np), full_blk),     # f2 (resident)
            pl.BlockSpec((Np, Dp), full_blk),    # Wh full (bf16, resident)
            pl.BlockSpec((Dp, Dp), full_blk),    # t2 (resident)
        ],
        out_specs=(pl.BlockSpec((TM, Dp), row_tile),    # emb tile (bf16)
                   pl.BlockSpec((TM, Dp), row_tile)),   # con_att tile (f32)
        compiler_params=par_params,
    )(adj_i8, f1, f2, wh, t2)

    # ------------------------------------------------------------------ Pass 3
    con_adj_p = pl.pallas_call(
        _struct_recon_kernel,
        out_shape=jax.ShapeDtypeStruct((Np, Np), f32),
        grid=(n_tiles3,),
        in_specs=[pl.BlockSpec((TM3, Dp), row_tile),     # emb row tile (bf16)
                  pl.BlockSpec((Np, Dp), full_blk)],     # emb full (bf16, resident)
        out_specs=pl.BlockSpec((TM3, Np), row_tile),
        compiler_params=par_params,
    )(emb, emb)

    return con_adj_p[:N, :N], con_att_p[:N, :D]


# --------------------------------------------------------------------------- test


def _reference(x, adj, p):
    structure = jnp.maximum(x @ p["wf"] + p["bf"], 0.0)
    Wh = structure @ p["wg"]
    e = (Wh * p["a1"]).sum(1, keepdims=True) + (Wh * p["a2"]).sum(1, keepdims=True).T
    e = jnp.where(e > 0, e, 0.2 * e)
    e = jnp.where(adj > 0, e, -9e15)
    att = jax.nn.softmax(e, axis=1)
    h_prime = att @ Wh
    emb = jnp.where(h_prime > 0, h_prime, jnp.exp(h_prime) - 1.0)
    t1 = jnp.maximum(x.T @ p["w1"] + p["b1"], 0.0)
    t2 = jnp.maximum(t1 @ p["w2"] + p["b2"], 0.0)
    return emb @ emb.T, emb @ t2.T


if __name__ == "__main__":
    num_nodes, in_dim, hidden_dim = 200, 12, 32   # small; >128 nodes exercises tiling

    key = jax.random.PRNGKey(0)
    ks = jax.random.split(key, 12)
    scale = 0.1
    params = {
        # Linear(in_dim, hidden_dim) -> stored transposed (in_dim, hidden_dim)
        "wf": scale * jax.random.normal(ks[0], (in_dim, hidden_dim), jnp.float32),
        "bf": scale * jax.random.normal(ks[1], (1, hidden_dim), jnp.float32),
        # GAT: W (hidden_dim, in_dim), attention vector split into two (1, in_dim)
        "wg": scale * jax.random.normal(ks[2], (hidden_dim, in_dim), jnp.float32),
        "a1": scale * jax.random.normal(ks[3], (1, in_dim), jnp.float32),
        "a2": scale * jax.random.normal(ks[4], (1, in_dim), jnp.float32),
        # Linear(num_nodes, hidden_dim) -> (num_nodes, hidden_dim)
        "w1": scale * jax.random.normal(ks[5], (num_nodes, hidden_dim), jnp.float32),
        "b1": scale * jax.random.normal(ks[6], (1, hidden_dim), jnp.float32),
        # Linear(hidden_dim, in_dim) -> (hidden_dim, in_dim)
        "w2": scale * jax.random.normal(ks[7], (hidden_dim, in_dim), jnp.float32),
        "b2": scale * jax.random.normal(ks[8], (1, in_dim), jnp.float32),
    }

    x = jax.random.normal(ks[9], (num_nodes, in_dim), jnp.float32)
    # symmetric-ish binary adjacency with self loops (every row has >=1 neighbor)
    a = (jax.random.uniform(ks[10], (num_nodes, num_nodes)) > 0.8).astype(jnp.float32)
    adj = jnp.clip(a + a.T + jnp.eye(num_nodes, dtype=jnp.float32), 0.0, 1.0)

    ref_adj, ref_att = _reference(x, adj, params)

    # (1) auto-sized tiles (architecture-aware VMEM budget)
    con_adj, con_att = anomaly_dae_forward(x, adj, params)
    # (2) forced 128-row tiles -> multi-step grid path is exercised at this size
    con_adj_t, con_att_t = anomaly_dae_forward(x, adj, params, tile_rows=128)
    jax.block_until_ready((con_adj, con_att, con_adj_t, con_att_t))

    assert con_adj.shape == (num_nodes, num_nodes)
    assert con_att.shape == (num_nodes, in_dim)
    # tolerance covers bf16 MXU operands + the EUP approximate reciprocal in softmax
    tol = dict(atol=1e-2, rtol=1e-2)
    assert jnp.allclose(con_adj, ref_adj, **tol)
    assert jnp.allclose(con_att, ref_att, **tol)
    assert jnp.allclose(con_adj_t, ref_adj, **tol)
    assert jnp.allclose(con_att_t, ref_att, **tol)

    print("KERNEL_OK")
</pallas_src>

<mosaic_0001>
module attributes {stable_mosaic.version = 11 : i64} {
  func.func @_prep_kernel(%arg0: i32, %arg1: memref<256x128xf32, #tpu.memory_space<vmem>>, %arg2: memref<128x128xf32, #tpu.memory_space<vmem>>, %arg3: memref<1x128xf32, #tpu.memory_space<vmem>>, %arg4: memref<128x128xf32, #tpu.memory_space<vmem>>, %arg5: memref<1x128xf32, #tpu.memory_space<vmem>>, %arg6: memref<1x128xf32, #tpu.memory_space<vmem>>, %arg7: memref<256x128xf32, #tpu.memory_space<vmem>>, %arg8: memref<1x128xf32, #tpu.memory_space<vmem>>, %arg9: memref<128x128xf32, #tpu.memory_space<vmem>>, %arg10: memref<1x128xf32, #tpu.memory_space<vmem>>, %arg11: memref<256x128xbf16, #tpu.memory_space<vmem>>, %arg12: memref<256x1xf32, #tpu.memory_space<vmem>>, %arg13: memref<1x256xf32, #tpu.memory_space<vmem>>, %arg14: memref<128x128xf32, #tpu.memory_space<vmem>>, %arg15: memref<128x128xf32, #tpu.memory_space<vmem>>) attributes {dimension_semantics = [#tpu.dimension_semantics<arbitrary>], iteration_bounds = array<i64: 1>, scalar_prefetch = 0 : i64, scratch_operands = 1 : i64, tpu.core_type = #tpu.core_type<tc>, window_params = [{transform_indices = @transform_0, window_bounds = array<i64: 256, 128>}, {pipeline_mode = #tpu.pipeline_mode<synchronous>, transform_indices = @transform_1, window_bounds = array<i64: 128, 128>}, {pipeline_mode = #tpu.pipeline_mode<synchronous>, transform_indices = @transform_2, window_bounds = array<i64: 1, 128>}, {pipeline_mode = #tpu.pipeline_mode<synchronous>, transform_indices = @transform_3, window_bounds = array<i64: 128, 128>}, {pipeline_mode = #tpu.pipeline_mode<synchronous>, transform_indices = @transform_4, window_bounds = array<i64: 1, 128>}, {pipeline_mode = #tpu.pipeline_mode<synchronous>, transform_indices = @transform_5, window_bounds = array<i64: 1, 128>}, {transform_indices = @transform_6, window_bounds = array<i64: 256, 128>}, {pipeline_mode = #tpu.pipeline_mode<synchronous>, transform_indices = @transform_7, window_bounds = array<i64: 1, 128>}, {pipeline_mode = #tpu.pipeline_mode<synchronous>, transform_indices = @transform_8, window_bounds = array<i64: 128, 128>}, {pipeline_mode = #tpu.pipeline_mode<synchronous>, transform_indices = @transform_9, window_bounds = array<i64: 1, 128>}, {transform_indices = @transform_10, window_bounds = array<i64: 256, 128>}, {transform_indices = @transform_11, window_bounds = array<i64: 256, 1>}, {transform_indices = @transform_12, window_bounds = array<i64: 1, 256>}, {pipeline_mode = #tpu.pipeline_mode<synchronous>, transform_indices = @transform_13, window_bounds = array<i64: 128, 128>}]} {
    %c0_i32 = arith.constant 0 : i32
    %0 = arith.cmpi eq, %arg0, %c0_i32 : i32
    %1 = arith.extui %0 : i1 to i32
    %c0_i32_0 = arith.constant 0 : i32
    %2 = arith.cmpi ne, %1, %c0_i32_0 : i32
    scf.if %2 {
      %cst_32 = arith.constant 0.000000e+00 : f32
      %39 = vector.broadcast %cst_32 : f32 to vector<128x128xf32>
      %c0_33 = arith.constant 0 : index
      %c0_34 = arith.constant 0 : index
      %40 = vector.load %arg15[%c0_33, %c0_34] : memref<128x128xf32, #tpu.memory_space<vmem>>, vector<128x128xf32>
      tpu.vector_store %arg15[%c0_33, %c0_34], %39 {strides = array<i32>} : memref<128x128xf32, #tpu.memory_space<vmem>>, vector<128x128xf32>,
    } else {
    }
    %c0 = arith.constant 0 : index
    %c0_1 = arith.constant 0 : index
    %3 = vector.load %arg1[%c0, %c0_1] : memref<256x128xf32, #tpu.memory_space<vmem>>, vector<256x128xf32>
    %c0_2 = arith.constant 0 : index
    %c0_3 = arith.constant 0 : index
    %4 = vector.load %arg2[%c0_2, %c0_3] : memref<128x128xf32, #tpu.memory_space<vmem>>, vector<128x128xf32>
    %cst = arith.constant dense<0.000000e+00> : vector<256x128xf32>
    %5 = tpu.matmul %3, %4, %cst {dimension_numbers = #tpu.dot_dimension_numbers<[1], [0], [0], [1], [0, 0, 1, 1], [], []>} : vector<256x128xf32>, vector<128x128xf32>, vector<256x128xf32> -> vector<256x128xf32>
    %c0_4 = arith.constant 0 : index
    %c0_5 = arith.constant 0 : index
    %6 = vector.load %arg3[%c0_4, %c0_5] : memref<1x128xf32, #tpu.memory_space<vmem>>, vector<1x128xf32>
    %7 = vector.broadcast %6 : vector<1x128xf32> to vector<256x128xf32>
    %8 = arith.addf %5, %7 : vector<256x128xf32>
    %cst_6 = arith.constant 0.000000e+00 : f32
    %9 = vector.broadcast %cst_6 : f32 to vector<256x128xf32>
    %10 = arith.maximumf %8, %9 : vector<256x128xf32>
    %c0_7 = arith.constant 0 : index
    %c0_8 = arith.constant 0 : index
    %11 = vector.load %arg4[%c0_7, %c0_8] : memref<128x128xf32, #tpu.memory_space<vmem>>, vector<128x128xf32>
    %cst_9 = arith.constant dense<0.000000e+00> : vector<256x128xf32>
    %12 = tpu.matmul %10, %11, %cst_9 {dimension_numbers = #tpu.dot_dimension_numbers<[1], [0], [0], [1], [0, 0, 1, 1], [], []>} : vector<256x128xf32>, vector<128x128xf32>, vector<256x128xf32> -> vector<256x128xf32>
    %c256_i32 = arith.constant 256 : i32
    %13 = arith.muli %arg0, %c256_i32 : i32
    %14 = tpu.iota {dimensions = array<i32: 0>} : vector<256x1xi32>
    %15 = vector.broadcast %13 : i32 to vector<256x1xi32>
    %16 = arith.addi %15, %14 : vector<256x1xi32>
    %c200_i32 = arith.constant 200 : i32
    %17 = vector.broadcast %c200_i32 : i32 to vector<256x1xi32>
    %18 = arith.cmpi slt, %16, %17 : vector<256x1xi32>
    %cst_10 = arith.constant 0.000000e+00 : f32
    %19 = vector.shape_cast %18 : vector<256x1xi1> to vector<256x1xi1>
    %20 = vector.broadcast %19 : vector<256x1xi1> to vector<256x128xi1>
    %21 = vector.broadcast %cst_10 : f32 to vector<256x128xf32>
    %22 = arith.select %20, %12, %21 : vector<256x128xi1>, vector<256x128xf32>
    %23 = arith.truncf %22 : vector<256x128xf32> to vector<256x128xbf16>
    %c0_11 = arith.constant 0 : index
    %c0_12 = arith.constant 0 : index
    %24 = vector.load %arg11[%c0_11, %c0_12] : memref<256x128xbf16, #tpu.memory_space<vmem>>, vector<256x128xbf16>
    tpu.vector_store %arg11[%c0_11, %c0_12], %23 {strides = array<i32>} : memref<256x128xbf16, #tpu.memory_space<vmem>>, vector<256x128xbf16>,
    %c0_13 = arith.constant 0 : index
    %c0_14 = arith.constant 0 : index
    %25 = vector.load %arg5[%c0_13, %c0_14] : memref<1x128xf32, #tpu.memory_space<vmem>>, vector<1x128xf32>
    %cst_15 = arith.constant dense<0.000000e+00> : vector<256x1xf32>
    %26 = tpu.matmul %22, %25, %cst_15 {dimension_numbers = #tpu.dot_dimension_numbers<[1], [1], [0], [0], [0, 0, 1, 0], [], []>} : vector<256x128xf32>, vector<1x128xf32>, vector<256x1xf32> -> vector<256x1xf32>
    %c0_16 = arith.constant 0 : index
    %c0_17 = arith.constant 0 : index
    %27 = vector.load %arg12[%c0_16, %c0_17] : memref<256x1xf32, #tpu.memory_space<vmem>>, vector<256x1xf32>
    tpu.vector_store %arg12[%c0_16, %c0_17], %26 {strides = array<i32>} : memref<256x1xf32, #tpu.memory_space<vmem>>, vector<256x1xf32>,
    %c0_18 = arith.constant 0 : index
    %c0_19 = arith.constant 0 : index
    %28 = vector.load %arg6[%c0_18, %c0_19] : memref<1x128xf32, #tpu.memory_space<vmem>>, vector<1x128xf32>
    %cst_20 = arith.constant dense<0.000000e+00> : vector<1x256xf32>
    %29 = tpu.matmul %28, %22, %cst_20 {dimension_numbers = #tpu.dot_dimension_numbers<[1], [1], [0], [0], [0, 0, 1, 0], [], []>} : vector<1x128xf32>, vector<256x128xf32>, vector<1x256xf32> -> vector<1x256xf32>
    %c0_21 = arith.constant 0 : index
    %c0_22 = arith.constant 0 : index
    %30 = vector.load %arg13[%c0_21, %c0_22] : memref<1x256xf32, #tpu.memory_space<vmem>>, vector<1x256xf32>
    tpu.vector_store %arg13[%c0_21, %c0_22], %29 {strides = array<i32>} : memref<1x256xf32, #tpu.memory_space<vmem>>, vector<1x256xf32>,
    %c0_23 = arith.constant 0 : index
    %c0_24 = arith.constant 0 : index
    %31 = vector.load %arg15[%c0_23, %c0_24] : memref<128x128xf32, #tpu.memory_space<vmem>>, vector<128x128xf32>
    %c0_25 = arith.constant 0 : index
    %c0_26 = arith.constant 0 : index
    %32 = vector.load %arg7[%c0_25, %c0_26] : memref<256x128xf32, #tpu.memory_space<vmem>>, vector<256x128xf32>
    %cst_27 = arith.constant dense<0.000000e+00> : vector<128x128xf32>
    %33 = tpu.matmul %3, %32, %cst_27 {dimension_numbers = #tpu.dot_dimension_numbers<[0], [0], [1], [1], [0, 1, 1, 1], [], []>} : vector<256x128xf32>, vector<256x128xf32>, vector<128x128xf32> -> vector<128x128xf32>
    %34 = arith.addf %31, %33 : vector<128x128xf32>
    %c0_28 = arith.constant 0 : index
    %c0_29 = arith.constant 0 : index
    %35 = vector.load %arg15[%c0_28, %c0_29] : memref<128x128xf32, #tpu.memory_space<vmem>>, vector<128x128xf32>
    tpu.vector_store %arg15[%c0_28, %c0_29], %34 {strides = array<i32>} : memref<128x128xf32, #tpu.memory_space<vmem>>, vector<128x128xf32>,
    %c0_i32_30 = arith.constant 0 : i32
    %36 = arith.cmpi eq, %arg0, %c0_i32_30 : i32
    %37 = arith.extui %36 : i1 to i32
    %c0_i32_31 = arith.constant 0 : i32
    %38 = arith.cmpi ne, %37, %c0_i32_31 : i32
    scf.if %38 {
      %c0_32 = arith.constant 0 : index
      %c0_33 = arith.constant 0 : index
      %39 = vector.load %arg15[%c0_32, %c0_33] : memref<128x128xf32, #tpu.memory_space<vmem>>, vector<128x128xf32>
      %c0_34 = arith.constant 0 : index
      %c0_35 = arith.constant 0 : index
      %40 = vector.load %arg8[%c0_34, %c0_35] : memref<1x128xf32, #tpu.memory_space<vmem>>, vector<1x128xf32>
      %41 = vector.broadcast %40 : vector<1x128xf32> to vector<128x128xf32>
      %42 = arith.addf %39, %41 : vector<128x128xf32>
      %cst_36 = arith.constant 0.000000e+00 : f32
      %43 = vector.broadcast %cst_36 : f32 to vector<128x128xf32>
      %44 = arith.maximumf %42, %43 : vector<128x128xf32>
      %c0_37 = arith.constant 0 : index
      %c0_38 = arith.constant 0 : index
      %45 = vector.load %arg9[%c0_37, %c0_38] : memref<128x128xf32, #tpu.memory_space<vmem>>, vector<128x128xf32>
      %cst_39 = arith.constant dense<0.000000e+00> : vector<128x128xf32>
      %46 = tpu.matmul %44, %45, %cst_39 {dimension_numbers = #tpu.dot_dimension_numbers<[1], [0], [0], [1], [0, 0, 1, 1], [], []>} : vector<128x128xf32>, vector<128x128xf32>, vector<128x128xf32> -> vector<128x128xf32>
      %c0_40 = arith.constant 0 : index
      %c0_41 = arith.constant 0 : index
      %47 = vector.load %arg10[%c0_40, %c0_41] : memref<1x128xf32, #tpu.memory_space<vmem>>, vector<1x128xf32>
      %48 = vector.broadcast %47 : vector<1x128xf32> to vector<128x128xf32>
      %49 = arith.addf %46, %48 : vector<128x128xf32>
      %cst_42 = arith.constant 0.000000e+00 : f32
      %50 = vector.broadcast %cst_42 : f32 to vector<128x128xf32>
      %51 = arith.maximumf %49, %50 : vector<128x128xf32>
      %c0_43 = arith.constant 0 : index
      %c0_44 = arith.constant 0 : index
      %52 = vector.load %arg14[%c0_43, %c0_44] : memref<128x128xf32, #tpu.memory_space<vmem>>, vector<128x128xf32>
      tpu.vector_store %arg14[%c0_43, %c0_44], %51 {strides = array<i32>} : memref<128x128xf32, #tpu.memory_space<vmem>>, vector<128x128xf32>,
    } else {
    }
    return
  }
  func.func @transform_0(%arg0: i32) -> (i32, i32) {
    %c0_i32 = arith.constant 0 : i32
    %c0_i32_0 = arith.constant 0 : i32
    return %arg0, %c0_i32 : i32, i32
  }
  func.func @transform_1(%arg0: i32) -> (i32, i32) {
    %c0_i32 = arith.constant 0 : i32
    %c0_i32_0 = arith.constant 0 : i32
    %c0_i32_1 = arith.constant 0 : i32
    return %c0_i32, %c0_i32_0 : i32, i32
  }
  func.func @transform_2(%arg0: i32) -> (i32, i32) {
    %c0_i32 = arith.constant 0 : i32
    %c0_i32_0 = arith.constant 0 : i32
    %c0_i32_1 = arith.constant 0 : i32
    return %c0_i32, %c0_i32_0 : i32, i32
  }
  func.func @transform_3(%arg0: i32) -> (i32, i32) {
    %c0_i32 = arith.constant 0 : i32
    %c0_i32_0 = arith.constant 0 : i32
    %c0_i32_1 = arith.constant 0 : i32
    return %c0_i32, %c0_i32_0 : i32, i32
  }
  func.func @transform_4(%arg0: i32) -> (i32, i32) {
    %c0_i32 = arith.constant 0 : i32
    %c0_i32_0 = arith.constant 0 : i32
    %c0_i32_1 = arith.constant 0 : i32
    return %c0_i32, %c0_i32_0 : i32, i32
  }
  func.func @transform_5(%arg0: i32) -> (i32, i32) {
    %c0_i32 = arith.constant 0 : i32
    %c0_i32_0 = arith.constant 0 : i32
    %c0_i32_1 = arith.constant 0 : i32
    return %c0_i32, %c0_i32_0 : i32, i32
  }
  func.func @transform_6(%arg0: i32) -> (i32, i32) {
    %c0_i32 = arith.constant 0 : i32
    %c0_i32_0 = arith.constant 0 : i32
    return %arg0, %c0_i32 : i32, i32
  }
  func.func @transform_7(%arg0: i32) -> (i32, i32) {
    %c0_i32 = arith.constant 0 : i32
    %c0_i32_0 = arith.constant 0 : i32
    %c0_i32_1 = arith.constant 0 : i32
    return %c0_i32, %c0_i32_0 : i32, i32
  }
  func.func @transform_8(%arg0: i32) -> (i32, i32) {
    %c0_i32 = arith.constant 0 : i32
    %c0_i32_0 = arith.constant 0 : i32
    %c0_i32_1 = arith.constant 0 : i32
    return %c0_i32, %c0_i32_0 : i32, i32
  }
  func.func @transform_9(%arg0: i32) -> (i32, i32) {
    %c0_i32 = arith.constant 0 : i32
    %c0_i32_0 = arith.constant 0 : i32
    %c0_i32_1 = arith.constant 0 : i32
    return %c0_i32, %c0_i32_0 : i32, i32
  }
  func.func @transform_10(%arg0: i32) -> (i32, i32) {
    %c0_i32 = arith.constant 0 : i32
    %c0_i32_0 = arith.constant 0 : i32
    return %arg0, %c0_i32 : i32, i32
  }
  func.func @transform_11(%arg0: i32) -> (i32, i32) {
    %c0_i32 = arith.constant 0 : i32
    %c0_i32_0 = arith.constant 0 : i32
    return %arg0, %c0_i32 : i32, i32
  }
  func.func @transform_12(%arg0: i32) -> (i32, i32) {
    %c0_i32 = arith.constant 0 : i32
    %c0_i32_0 = arith.constant 0 : i32
    return %c0_i32, %arg0 : i32, i32
  }
  func.func @transform_13(%arg0: i32) -> (i32, i32) {
    %c0_i32 = arith.constant 0 : i32
    %c0_i32_0 = arith.constant 0 : i32
    %c0_i32_1 = arith.constant 0 : i32
    return %c0_i32, %c0_i32_0 : i32, i32
  }
}

</mosaic_0001>

<llo_original>
// kernel: tpu_custom_call.1
$region0: #{tpu_custom_call.1}
  #allocation0 [shape = 'u32[]', space=smem, size = 0x4, offset = 0x4, fixed_abs, tag = 'smem constant byte address 0x4 - core index']
  #allocation1 [shape = 'u32[72,128]{1,0:T(1,128)}', space=vmem, size = 0x9000, scoped, tag = 'internal scratch']
  #allocation2 [shape = 'f32[128,128]{1,0:T(8,128)}', space=vmem, size = 0x10000, scoped, tag = 'scratch operand']
  %s0 = inlined_call_operand.hbm [shape: f32[256,128], index: 0, kind: input, shape index: {}]
  %s1 = inlined_call_operand.hbm [shape: f32[128,128], index: 1, kind: input, shape index: {}]
  %s2 = inlined_call_operand.vmem [shape: f32[1,128], index: 2, kind: input, shape index: {}]
  %s3 = inlined_call_operand.hbm [shape: f32[128,128], index: 3, kind: input, shape index: {}]
  %s4 = inlined_call_operand.vmem [shape: f32[1,128], index: 4, kind: input, shape index: {}]
  %s5 = inlined_call_operand.vmem [shape: f32[1,128], index: 5, kind: input, shape index: {}]
  %s6 = inlined_call_operand.hbm [shape: f32[256,128], index: 6, kind: input, shape index: {}]
  %s7 = inlined_call_operand.vmem [shape: f32[1,128], index: 7, kind: input, shape index: {}]
  %s8 = inlined_call_operand.hbm [shape: f32[128,128], index: 8, kind: input, shape index: {}]
  %s9 = inlined_call_operand.vmem [shape: f32[1,128], index: 9, kind: input, shape index: {}]
  %s10 = inlined_call_operand.hbm [shape: bf16[256,128], index: 10, kind: output, shape index: {0}]
  %s11 = inlined_call_operand.vmem [shape: f32[256,1], index: 11, kind: output, shape index: {1}]
  %s12 = inlined_call_operand.hbm [shape: f32[1,256], index: 12, kind: output, shape index: {2}]
  %s13 = inlined_call_operand.hbm [shape: f32[128,128], index: 13, kind: output, shape index: {3}]
  %14 = xla_tuple %s10, %s11, %s12, %s13
  %s15 = sld [smem:[#allocation0]]
  $region102: #{tpu_custom_call.1} parent=0
    _
  %s17 = ssub.s32 1, %s15
  %s18 = scalar_select 0, %s17, %s15
  $region1: #{tpu_custom_call.1} parent=0
    #allocation3 [shape = 'u8[131072]{0}', space=vmem, size = 0x20000, scoped, tag = 'input window, operand 0, single buffered']
    #allocation4 [shape = 's32[1]{0}', space=sflag, size = 0x4, scoped, tag = 'scoped memory for tpu_custom_call.1']
    #allocation5 [shape = 's32[1]{0}', space=sflag, size = 0x4, scoped, tag = 'scoped memory for tpu_custom_call.1']
    #allocation6 [shape = 'u8[65536]{0}', space=vmem, size = 0x10000, scoped, tag = 'input window, operand 1, single buffered']
    #allocation7 [shape = 's32[1]{0}', space=sflag, size = 0x4, scoped, tag = 'scoped memory for tpu_custom_call.1']
    #allocation8 [shape = 'u8[65536]{0}', space=vmem, size = 0x10000, scoped, tag = 'input window, operand 3, single buffered']
    #allocation9 [shape = 'u8[131072]{0}', space=vmem, size = 0x20000, scoped, tag = 'input window, operand 6, single buffered']
    #allocation10 [shape = 's32[1]{0}', space=sflag, size = 0x4, scoped, tag = 'scoped memory for tpu_custom_call.1']
    #allocation11 [shape = 'u8[65536]{0}', space=vmem, size = 0x10000, scoped, tag = 'input window, operand 8, single buffered']
    #allocation12 [shape = 'u8[65536]{0}', space=vmem, size = 0x10000, scoped, tag = 'output window, operand 0, single buffered']
    #allocation13 [shape = 'u8[1024]{0}', space=vmem, size = 0x400, scoped, tag = 'output window, operand 2, single buffered']
    #allocation14 [shape = 's32[1]{0}', space=sflag, size = 0x4, scoped, tag = 'scoped memory for tpu_custom_call.1']
    #allocation15 [shape = 'u8[65536]{0}', space=vmem, size = 0x10000, scoped, tag = 'output window, operand 3, single buffered']
    %19 = vsyncpa [#allocation4], 0
    %20 = vsyncpa [#allocation7], 0
    %21 = vsyncpa [#allocation10], 0
    %22 = vsyncpa [#allocation5], 0
    %23 = vsyncpa [#allocation14], 0
    // Predicated region
    $region2: #{tpu_custom_call.1} parent=1 // pred_check
      _
    $region3: #{tpu_custom_call.1} parent=1 // pred_check_branch
      %25 = sbr.rel (0) target = $region5
    $region4: #{tpu_custom_call.1} parent=1 // pred_region
      %27 = vsyncadd [#allocation4], 0
      %s28 = sshll.u32 %s0, 4
      %s29 = int_to_ptr.hbm [resolvable:$true] %s28
      %s30 = sshll.u32 [#allocation3], 4
      %s31 = int_to_ptr.vmem [resolvable:$true] %s30
      %36 = dma.hbm_to_vmem [thread:$0]  %s29, 4096, %s31, [#allocation4], 128, 128, 8
    $region5: #{tpu_custom_call.1} parent=1 // pred_fallthru
      _
    // Predicated region
    $region6: #{tpu_custom_call.1} parent=1 // pred_check
      _
    $region7: #{tpu_custom_call.1} parent=1 // pred_check_branch
      %38 = sbr.rel (0) target = $region9
    $region8: #{tpu_custom_call.1} parent=1 // pred_region
      %40 = vsyncadd [#allocation7], 0
      %s41 = sshll.u32 %s1, 4
      %s42 = int_to_ptr.hbm [resolvable:$true] %s41
      %s43 = sshll.u32 [#allocation6], 4
      %s44 = int_to_ptr.vmem [resolvable:$true] %s43
      %49 = dma.hbm_to_vmem [thread:$0]  %s42, 2048, %s44, [#allocation7], 128, 128, 8
    $region9: #{tpu_custom_call.1} parent=1 // pred_fallthru
      _
    // Predicated region
    $region10: #{tpu_custom_call.1} parent=1 // pred_check
      _
    $region11: #{tpu_custom_call.1} parent=1 // pred_check_branch
      %51 = sbr.rel (0) target = $region13
    $region12: #{tpu_custom_call.1} parent=1 // pred_region
      _
    $region13: #{tpu_custom_call.1} parent=1 // pred_fallthru
      _
    // Predicated region
    $region14: #{tpu_custom_call.1} parent=1 // pred_check
      _
    $region15: #{tpu_custom_call.1} parent=1 // pred_check_branch
      %53 = sbr.rel (0) target = $region17
    $region16: #{tpu_custom_call.1} parent=1 // pred_region
      %55 = vsyncadd [#allocation7], 0
      %s56 = sshll.u32 %s3, 4
      %s57 = int_to_ptr.hbm [resolvable:$true] %s56
      %s58 = sshll.u32 [#allocation8], 4
      %s59 = int_to_ptr.vmem [resolvable:$true] %s58
      %64 = dma.hbm_to_vmem [thread:$0]  %s57, 2048, %s59, [#allocation7], 128, 128, 8
    $region17: #{tpu_custom_call.1} parent=1 // pred_fallthru
      _
    // Predicated region
    $region18: #{tpu_custom_call.1} parent=1 // pred_check
      _
    $region19: #{tpu_custom_call.1} parent=1 // pred_check_branch
      %66 = sbr.rel (0) target = $region21
    $region20: #{tpu_custom_call.1} parent=1 // pred_region
      _
    $region21: #{tpu_custom_call.1} parent=1 // pred_fallthru
      _
    // Predicated region
    $region22: #{tpu_custom_call.1} parent=1 // pred_check
      _
    $region23: #{tpu_custom_call.1} parent=1 // pred_check_branch
      %68 = sbr.rel (0) target = $region25
    $region24: #{tpu_custom_call.1} parent=1 // pred_region
      _
    $region25: #{tpu_custom_call.1} parent=1 // pred_fallthru
      _
    // Predicated region
    $region26: #{tpu_custom_call.1} parent=1 // pred_check
      _
    $region27: #{tpu_custom_call.1} parent=1 // pred_check_branch
      %70 = sbr.rel (0) target = $region29
    $region28: #{tpu_custom_call.1} parent=1 // pred_region
      %72 = vsyncadd [#allocation10], 0
      %s73 = sshll.u32 %s6, 4
      %s74 = int_to_ptr.hbm [resolvable:$true] %s73
      %s75 = sshll.u32 [#allocation9], 4
      %s76 = int_to_ptr.vmem [resolvable:$true] %s75
      %81 = dma.hbm_to_vmem [thread:$0]  %s74, 4096, %s76, [#allocation10], 128, 128, 8
    $region29: #{tpu_custom_call.1} parent=1 // pred_fallthru
      _
    // Predicated region
    $region30: #{tpu_custom_call.1} parent=1 // pred_check
      _
    $region31: #{tpu_custom_call.1} parent=1 // pred_check_branch
      %83 = sbr.rel (0) target = $region33
    $region32: #{tpu_custom_call.1} parent=1 // pred_region
      _
    $region33: #{tpu_custom_call.1} parent=1 // pred_fallthru
      _
    // Predicated region
    $region34: #{tpu_custom_call.1} parent=1 // pred_check
      _
    $region35: #{tpu_custom_call.1} parent=1 // pred_check_branch
      %85 = sbr.rel (0) target = $region37
    $region36: #{tpu_custom_call.1} parent=1 // pred_region
      %87 = vsyncadd [#allocation10], 0
      %s88 = sshll.u32 %s8, 4
      %s89 = int_to_ptr.hbm [resolvable:$true] %s88
      %s90 = sshll.u32 [#allocation11], 4
      %s91 = int_to_ptr.vmem [resolvable:$true] %s90
      %96 = dma.hbm_to_vmem [thread:$0]  %s89, 2048, %s91, [#allocation10], 128, 128, 8
    $region37: #{tpu_custom_call.1} parent=1 // pred_fallthru
      _
    // Predicated region
    $region38: #{tpu_custom_call.1} parent=1 // pred_check
      _
    $region39: #{tpu_custom_call.1} parent=1 // pred_check_branch
      %98 = sbr.rel (0) target = $region41
    $region40: #{tpu_custom_call.1} parent=1 // pred_region
      _
    $region41: #{tpu_custom_call.1} parent=1 // pred_fallthru
      _
    // Predicated region
    $region42: #{tpu_custom_call.1} parent=1 // pred_check
      _
    $region43: #{tpu_custom_call.1} parent=1 // pred_check_branch
      %100 = sbr.rel (0) target = $region45
    $region44: #{tpu_custom_call.1} parent=1 // pred_region
      %102 = dma.done [#allocation4], 4096
    $region45: #{tpu_custom_call.1} parent=1 // pred_fallthru
      _
    // Predicated region
    $region46: #{tpu_custom_call.1} parent=1 // pred_check
      _
    $region47: #{tpu_custom_call.1} parent=1 // pred_check_branch
      %104 = sbr.rel (0) target = $region49
    $region48: #{tpu_custom_call.1} parent=1 // pred_region
      %106 = dma.done [#allocation7], 2048
    $region49: #{tpu_custom_call.1} parent=1 // pred_fallthru
      _
    // Predicated region
    $region50: #{tpu_custom_call.1} parent=1 // pred_check
      _
    $region51: #{tpu_custom_call.1} parent=1 // pred_check_branch
      %108 = sbr.rel (0) target = $region53
    $region52: #{tpu_custom_call.1} parent=1 // pred_region
      %110 = dma.done [#allocation7], 2048
    $region53: #{tpu_custom_call.1} parent=1 // pred_fallthru
      _
    // Predicated region
    $region54: #{tpu_custom_call.1} parent=1 // pred_check
      _
    $region55: #{tpu_custom_call.1} parent=1 // pred_check_branch
      %112 = sbr.rel (0) target = $region57
    $region56: #{tpu_custom_call.1} parent=1 // pred_region
      %114 = dma.done [#allocation10], 4096
    $region57: #{tpu_custom_call.1} parent=1 // pred_fallthru
      _
    // Predicated region
    $region58: #{tpu_custom_call.1} parent=1 // pred_check
      _
    $region59: #{tpu_custom_call.1} parent=1 // pred_check_branch
      %116 = sbr.rel (0) target = $region61
    $region60: #{tpu_custom_call.1} parent=1 // pred_region
      %118 = dma.done [#allocation10], 2048
    $region61: #{tpu_custom_call.1} parent=1 // pred_fallthru
      _
    %p119 = scmp.eq.s32.totalorder 0, 0
    // Predicated region
    $region62: #{tpu_custom_call.1} parent=1 // pred_check
      %p120 = pneg %p119
    $region63: #{tpu_custom_call.1} parent=1 // pred_check_branch
      %122 = sbr.rel (%p120) target = $region65
    $region64: #{tpu_custom_call.1} parent=1 // pred_region
      %123 = vst [vmem:[#allocation2] sm:$0xff] 0.0
      %124 = vst [vmem:[#allocation2 + $0x8] sm:$0xff] 0.0
      %125 = vst [vmem:[#allocation2 + $0x10] sm:$0xff] 0.0
      %126 = vst [vmem:[#allocation2 + $0x18] sm:$0xff] 0.0
      %127 = vst [vmem:[#allocation2 + $0x20] sm:$0xff] 0.0
      %128 = vst [vmem:[#allocation2 + $0x28] sm:$0xff] 0.0
      %129 = vst [vmem:[#allocation2 + $0x30] sm:$0xff] 0.0
      %130 = vst [vmem:[#allocation2 + $0x38] sm:$0xff] 0.0
      %131 = vst [vmem:[#allocation2 + $0x40] sm:$0xff] 0.0
      %132 = vst [vmem:[#allocation2 + $0x48] sm:$0xff] 0.0
      %133 = vst [vmem:[#allocation2 + $0x50] sm:$0xff] 0.0
      %134 = vst [vmem:[#allocation2 + $0x58] sm:$0xff] 0.0
      %135 = vst [vmem:[#allocation2 + $0x60] sm:$0xff] 0.0
      %136 = vst [vmem:[#allocation2 + $0x68] sm:$0xff] 0.0
      %137 = vst [vmem:[#allocation2 + $0x70] sm:$0xff] 0.0
      %138 = vst [vmem:[#allocation2 + $0x78] sm:$0xff] 0.0
    $region65: #{tpu_custom_call.1} parent=1 // pred_fallthru
      _
    %v139 = vld [vmem:[#allocation3] sm:$0xff]
    %v140 = vld [vmem:[#allocation3 + $0x8] sm:$0xff]
    %v141 = vld [vmem:[#allocation3 + $0x10] sm:$0xff]
    %v142 = vld [vmem:[#allocation3 + $0x18] sm:$0xff]
    %v143 = vld [vmem:[#allocation3 + $0x20] sm:$0xff]
    %v144 = vld [vmem:[#allocation3 + $0x28] sm:$0xff]
    %v145 = vld [vmem:[#allocation3 + $0x30] sm:$0xff]
    %v146 = vld [vmem:[#allocation3 + $0x38] sm:$0xff]
    %v147 = vld [vmem:[#allocation3 + $0x40] sm:$0xff]
    %v148 = vld [vmem:[#allocation3 + $0x48] sm:$0xff]
    %v149 = vld [vmem:[#allocation3 + $0x50] sm:$0xff]
    %v150 = vld [vmem:[#allocation3 + $0x58] sm:$0xff]
    %v151 = vld [vmem:[#allocation3 + $0x60] sm:$0xff]
    %v152 = vld [vmem:[#allocation3 + $0x68] sm:$0xff]
    %v153 = vld [vmem:[#allocation3 + $0x70] sm:$0xff]
    %v154 = vld [vmem:[#allocation3 + $0x78] sm:$0xff]
    %v155 = vld [vmem:[#allocation3 + $0x80] sm:$0xff]
    %v156 = vld [vmem:[#allocation3 + $0x88] sm:$0xff]
    %v157 = vld [vmem:[#allocation3 + $0x90] sm:$0xff]
    %v158 = vld [vmem:[#allocation3 + $0x98] sm:$0xff]
    %v159 = vld [vmem:[#allocation3 + $0xa0] sm:$0xff]
    %v160 = vld [vmem:[#allocation3 + $0xa8] sm:$0xff]
    %v161 = vld [vmem:[#allocation3 + $0xb0] sm:$0xff]
    %v162 = vld [vmem:[#allocation3 + $0xb8] sm:$0xff]
    %v163 = vld [vmem:[#allocation3 + $0xc0] sm:$0xff]
    %v164 = vld [vmem:[#allocation3 + $0xc8] sm:$0xff]
    %v165 = vld [vmem:[#allocation3 + $0xd0] sm:$0xff]
    %v166 = vld [vmem:[#allocation3 + $0xd8] sm:$0xff]
    %v167 = vld [vmem:[#allocation3 + $0xe0] sm:$0xff]
    %v168 = vld [vmem:[#allocation3 + $0xe8] sm:$0xff]
    %v169 = vld [vmem:[#allocation3 + $0xf0] sm:$0xff]
    %v170 = vld [vmem:[#allocation3 + $0xf8] sm:$0xff]
    %v171 = vld [vmem:[#allocation6] sm:$0xff]
    %v172 = vld [vmem:[#allocation6 + $0x8] sm:$0xff]
    %v173 = vld [vmem:[#allocation6 + $0x10] sm:$0xff]
    %v174 = vld [vmem:[#allocation6 + $0x18] sm:$0xff]
    %v175 = vld [vmem:[#allocation6 + $0x20] sm:$0xff]
    %v176 = vld [vmem:[#allocation6 + $0x28] sm:$0xff]
    %v177 = vld [vmem:[#allocation6 + $0x30] sm:$0xff]
    %v178 = vld [vmem:[#allocation6 + $0x38] sm:$0xff]
    %v179 = vld [vmem:[#allocation6 + $0x40] sm:$0xff]
    %v180 = vld [vmem:[#allocation6 + $0x48] sm:$0xff]
    %v181 = vld [vmem:[#allocation6 + $0x50] sm:$0xff]
    %v182 = vld [vmem:[#allocation6 + $0x58] sm:$0xff]
    %v183 = vld [vmem:[#allocation6 + $0x60] sm:$0xff]
    %v184 = vld [vmem:[#allocation6 + $0x68] sm:$0xff]
    %v185 = vld [vmem:[#allocation6 + $0x70] sm:$0xff]
    %v186 = vld [vmem:[#allocation6 + $0x78] sm:$0xff]
    %v187 = vld [vmem:[%s2] sm:$0x1]
    %v189 = vperm.slane %v187, 0
    %191 = vmatpush.msra.mxu0 %v186
    %192 = vmatpush.msra.mxu0 %v185
    %193 = vmatpush.msra.mxu0 %v184
    %194 = vmatpush.msra.mxu0 %v183
    %195 = vmatpush.msra.mxu0 %v182
    %196 = vmatpush.msra.mxu0 %v181
    %197 = vmatpush.msra.mxu0 %v180
    %198 = vmatpush.msra.mxu0 %v179
    %199 = vmatpush.msra.mxu0 %v178
    %200 = vmatpush.msra.mxu0 %v177
    %201 = vmatpush.msra.mxu0 %v176
    %202 = vmatpush.msra.mxu0 %v175
    %203 = vmatpush.msra.mxu0 %v174
    %204 = vmatpush.msra.mxu0 %v173
    %205 = vmatpush.msra.mxu0 %v172
    %206 = vmatpush.msra.mxu0 %v171
    %207 = vmatmul.f32.gmra.mxu0 %v139
    %v208 = vpop.f32.mrf.mxu0
    %v209 = vadd.f32 %v189, %v208
    %210 = vmatmul.f32.gmra.mxu0 %v140
    %v211 = vpop.f32.mrf.mxu0
    %v212 = vadd.f32 %v189, %v211
    %213 = vmatmul.f32.gmra.mxu0 %v141
    %v214 = vpop.f32.mrf.mxu0
    %v215 = vadd.f32 %v189, %v214
    %216 = vmatmul.f32.gmra.mxu0 %v142
    %v217 = vpop.f32.mrf.mxu0
    %v218 = vadd.f32 %v189, %v217
    %219 = vmatmul.f32.gmra.mxu0 %v143
    %v220 = vpop.f32.mrf.mxu0
    %v221 = vadd.f32 %v189, %v220
    %222 = vmatmul.f32.gmra.mxu0 %v144
    %v223 = vpop.f32.mrf.mxu0
    %v224 = vadd.f32 %v189, %v223
    %225 = vmatmul.f32.gmra.mxu0 %v145
    %v226 = vpop.f32.mrf.mxu0
    %v227 = vadd.f32 %v189, %v226
    %228 = vmatmul.f32.gmra.mxu0 %v146
    %v229 = vpop.f32.mrf.mxu0
    %v230 = vadd.f32 %v189, %v229
    %231 = vmatmul.f32.gmra.mxu0 %v147
    %v232 = vpop.f32.mrf.mxu0
    %v233 = vadd.f32 %v189, %v232
    %234 = vmatmul.f32.gmra.mxu0 %v148
    %v235 = vpop.f32.mrf.mxu0
    %v236 = vadd.f32 %v189, %v235
    %237 = vmatmul.f32.gmra.mxu0 %v149
    %v238 = vpop.f32.mrf.mxu0
    %v239 = vadd.f32 %v189, %v238
    %240 = vmatmul.f32.gmra.mxu0 %v150
    %v241 = vpop.f32.mrf.mxu0
    %v242 = vadd.f32 %v189, %v241
    %243 = vmatmul.f32.gmra.mxu0 %v151
    %v244 = vpop.f32.mrf.mxu0
    %v245 = vadd.f32 %v189, %v244
    %246 = vmatmul.f32.gmra.mxu0 %v152
    %v247 = vpop.f32.mrf.mxu0
    %v248 = vadd.f32 %v189, %v247
    %249 = vmatmul.f32.gmra.mxu0 %v153
    %v250 = vpop.f32.mrf.mxu0
    %v251 = vadd.f32 %v189, %v250
    %252 = vmatmul.f32.gmra.mxu0 %v154
    %v253 = vpop.f32.mrf.mxu0
    %v254 = vadd.f32 %v189, %v253
    %255 = vmatmul.f32.gmra.mxu0 %v155
    %v256 = vpop.f32.mrf.mxu0
    %v257 = vadd.f32 %v189, %v256
    %258 = vmatmul.f32.gmra.mxu0 %v156
    %v259 = vpop.f32.mrf.mxu0
    %v260 = vadd.f32 %v189, %v259
    %261 = vmatmul.f32.gmra.mxu0 %v157
    %v262 = vpop.f32.mrf.mxu0
    %v263 = vadd.f32 %v189, %v262
    %264 = vmatmul.f32.gmra.mxu0 %v158
    %v265 = vpop.f32.mrf.mxu0
    %v266 = vadd.f32 %v189, %v265
    %267 = vmatmul.f32.gmra.mxu0 %v159
    %v268 = vpop.f32.mrf.mxu0
    %v269 = vadd.f32 %v189, %v268
    %270 = vmatmul.f32.gmra.mxu0 %v160
    %v271 = vpop.f32.mrf.mxu0
    %v272 = vadd.f32 %v189, %v271
    %273 = vmatmul.f32.gmra.mxu0 %v161
    %v274 = vpop.f32.mrf.mxu0
    %v275 = vadd.f32 %v189, %v274
    %276 = vmatmul.f32.gmra.mxu0 %v162
    %v277 = vpop.f32.mrf.mxu0
    %v278 = vadd.f32 %v189, %v277
    %279 = vmatmul.f32.gmra.mxu0 %v163
    %v280 = vpop.f32.mrf.mxu0
    %v281 = vadd.f32 %v189, %v280
    %282 = vmatmul.f32.gmra.mxu0 %v164
    %v283 = vpop.f32.mrf.mxu0
    %v284 = vadd.f32 %v189, %v283
    %285 = vmatmul.f32.gmra.mxu0 %v165
    %v286 = vpop.f32.mrf.mxu0
    %v287 = vadd.f32 %v189, %v286
    %288 = vmatmul.f32.gmra.mxu0 %v166
    %v289 = vpop.f32.mrf.mxu0
    %v290 = vadd.f32 %v189, %v289
    %291 = vmatmul.f32.gmra.mxu0 %v167
    %v292 = vpop.f32.mrf.mxu0
    %v293 = vadd.f32 %v189, %v292
    %294 = vmatmul.f32.gmra.mxu0 %v168
    %v295 = vpop.f32.mrf.mxu0
    %v296 = vadd.f32 %v189, %v295
    %297 = vmatmul.f32.gmra.mxu0 %v169
    %v298 = vpop.f32.mrf.mxu0
    %v299 = vadd.f32 %v189, %v298
    %300 = vmatmul.f32.gmra.mxu0 %v170
    %v301 = vpop.f32.mrf.mxu0
    %v302 = vadd.f32 %v189, %v301
    %303 = vdwg.mxu0
    %v304 = vmax.f32 %v209, 0.0
    %v305 = vmax.f32 %v212, 0.0
    %v306 = vmax.f32 %v215, 0.0
    %v307 = vmax.f32 %v218, 0.0
    %v308 = vmax.f32 %v221, 0.0
    %v309 = vmax.f32 %v224, 0.0
    %v310 = vmax.f32 %v227, 0.0
    %v311 = vmax.f32 %v230, 0.0
    %v312 = vmax.f32 %v233, 0.0
    %v313 = vmax.f32 %v236, 0.0
    %v314 = vmax.f32 %v239, 0.0
    %v315 = vmax.f32 %v242, 0.0
    %v316 = vmax.f32 %v245, 0.0
    %v317 = vmax.f32 %v248, 0.0
    %v318 = vmax.f32 %v251, 0.0
    %v319 = vmax.f32 %v254, 0.0
    %v320 = vmax.f32 %v257, 0.0
    %v321 = vmax.f32 %v260, 0.0
    %v322 = vmax.f32 %v263, 0.0
    %v323 = vmax.f32 %v266, 0.0
    %v324 = vmax.f32 %v269, 0.0
    %v325 = vmax.f32 %v272, 0.0
    %v326 = vmax.f32 %v275, 0.0
    %v327 = vmax.f32 %v278, 0.0
    %v328 = vmax.f32 %v281, 0.0
    %v329 = vmax.f32 %v284, 0.0
    %v330 = vmax.f32 %v287, 0.0
    %v331 = vmax.f32 %v290, 0.0
    %v332 = vmax.f32 %v293, 0.0
    %v333 = vmax.f32 %v296, 0.0
    %v334 = vmax.f32 %v299, 0.0
    %v335 = vmax.f32 %v302, 0.0
    %v336 = vld [vmem:[#allocation8] sm:$0xff]
    %v337 = vld [vmem:[#allocation8 + $0x8] sm:$0xff]
    %v338 = vld [vmem:[#allocation8 + $0x10] sm:$0xff]
    %v339 = vld [vmem:[#allocation8 + $0x18] sm:$0xff]
    %v340 = vld [vmem:[#allocation8 + $0x20] sm:$0xff]
    %v341 = vld [vmem:[#allocation8 + $0x28] sm:$0xff]
    %v342 = vld [vmem:[#allocation8 + $0x30] sm:$0xff]
    %v343 = vld [vmem:[#allocation8 + $0x38] sm:$0xff]
    %v344 = vld [vmem:[#allocation8 + $0x40] sm:$0xff]
    %v345 = vld [vmem:[#allocation8 + $0x48] sm:$0xff]
    %v346 = vld [vmem:[#allocation8 + $0x50] sm:$0xff]
    %v347 = vld [vmem:[#allocation8 + $0x58] sm:$0xff]
    %v348 = vld [vmem:[#allocation8 + $0x60] sm:$0xff]
    %v349 = vld [vmem:[#allocation8 + $0x68] sm:$0xff]
    %v350 = vld [vmem:[#allocation8 + $0x70] sm:$0xff]
    %v351 = vld [vmem:[#allocation8 + $0x78] sm:$0xff]
    %352 = vmatpush.msra.mxu0 %v351
    %353 = vmatpush.msra.mxu0 %v350
    %354 = vmatpush.msra.mxu0 %v349
    %355 = vmatpush.msra.mxu0 %v348
    %356 = vmatpush.msra.mxu0 %v347
    %357 = vmatpush.msra.mxu0 %v346
    %358 = vmatpush.msra.mxu0 %v345
    %359 = vmatpush.msra.mxu0 %v344
    %360 = vmatpush.msra.mxu0 %v343
    %361 = vmatpush.msra.mxu0 %v342
    %362 = vmatpush.msra.mxu0 %v341
    %363 = vmatpush.msra.mxu0 %v340
    %364 = vmatpush.msra.mxu0 %v339
    %365 = vmatpush.msra.mxu0 %v338
    %366 = vmatpush.msra.mxu0 %v337
    %367 = vmatpush.msra.mxu0 %v336
    %368 = vmatmul.f32.gmra.mxu0 %v304
    %v369 = vpop.f32.mrf.mxu0
    %v370 = vadd.f32 0.0, %v369
    %371 = vmatmul.f32.gmra.mxu0 %v305
    %v372 = vpop.f32.mrf.mxu0
    %v373 = vadd.f32 0.0, %v372
    %374 = vmatmul.f32.gmra.mxu0 %v306
    %v375 = vpop.f32.mrf.mxu0
    %v376 = vadd.f32 0.0, %v375
    %377 = vmatmul.f32.gmra.mxu0 %v307
    %v378 = vpop.f32.mrf.mxu0
    %v379 = vadd.f32 0.0, %v378
    %380 = vmatmul.f32.gmra.mxu0 %v308
    %v381 = vpop.f32.mrf.mxu0
    %v382 = vadd.f32 0.0, %v381
    %383 = vmatmul.f32.gmra.mxu0 %v309
    %v384 = vpop.f32.mrf.mxu0
    %v385 = vadd.f32 0.0, %v384
    %386 = vmatmul.f32.gmra.mxu0 %v310
    %v387 = vpop.f32.mrf.mxu0
    %v388 = vadd.f32 0.0, %v387
    %389 = vmatmul.f32.gmra.mxu0 %v311
    %v390 = vpop.f32.mrf.mxu0
    %v391 = vadd.f32 0.0, %v390
    %392 = vmatmul.f32.gmra.mxu0 %v312
    %v393 = vpop.f32.mrf.mxu0
    %v394 = vadd.f32 0.0, %v393
    %395 = vmatmul.f32.gmra.mxu0 %v313
    %v396 = vpop.f32.mrf.mxu0
    %v397 = vadd.f32 0.0, %v396
    %398 = vmatmul.f32.gmra.mxu0 %v314
    %v399 = vpop.f32.mrf.mxu0
    %v400 = vadd.f32 0.0, %v399
    %401 = vmatmul.f32.gmra.mxu0 %v315
    %v402 = vpop.f32.mrf.mxu0
    %v403 = vadd.f32 0.0, %v402
    %404 = vmatmul.f32.gmra.mxu0 %v316
    %v405 = vpop.f32.mrf.mxu0
    %v406 = vadd.f32 0.0, %v405
    %407 = vmatmul.f32.gmra.mxu0 %v317
    %v408 = vpop.f32.mrf.mxu0
    %v409 = vadd.f32 0.0, %v408
    %410 = vmatmul.f32.gmra.mxu0 %v318
    %v411 = vpop.f32.mrf.mxu0
    %v412 = vadd.f32 0.0, %v411
    %413 = vmatmul.f32.gmra.mxu0 %v319
    %v414 = vpop.f32.mrf.mxu0
    %v415 = vadd.f32 0.0, %v414
    %416 = vmatmul.f32.gmra.mxu0 %v320
    %v417 = vpop.f32.mrf.mxu0
    %v418 = vadd.f32 0.0, %v417
    %419 = vmatmul.f32.gmra.mxu0 %v321
    %v420 = vpop.f32.mrf.mxu0
    %v421 = vadd.f32 0.0, %v420
    %422 = vmatmul.f32.gmra.mxu0 %v322
    %v423 = vpop.f32.mrf.mxu0
    %v424 = vadd.f32 0.0, %v423
    %425 = vmatmul.f32.gmra.mxu0 %v323
    %v426 = vpop.f32.mrf.mxu0
    %v427 = vadd.f32 0.0, %v426
    %428 = vmatmul.f32.gmra.mxu0 %v324
    %v429 = vpop.f32.mrf.mxu0
    %v430 = vadd.f32 0.0, %v429
    %431 = vmatmul.f32.gmra.mxu0 %v325
    %v432 = vpop.f32.mrf.mxu0
    %v433 = vadd.f32 0.0, %v432
    %434 = vmatmul.f32.gmra.mxu0 %v326
    %v435 = vpop.f32.mrf.mxu0
    %v436 = vadd.f32 0.0, %v435
    %437 = vmatmul.f32.gmra.mxu0 %v327
    %v438 = vpop.f32.mrf.mxu0
    %v439 = vadd.f32 0.0, %v438
    %440 = vmatmul.f32.gmra.mxu0 %v328
    %v441 = vpop.f32.mrf.mxu0
    %v442 = vadd.f32 0.0, %v441
    %443 = vmatmul.f32.gmra.mxu0 %v329
    %v444 = vpop.f32.mrf.mxu0
    %v445 = vadd.f32 0.0, %v444
    %446 = vmatmul.f32.gmra.mxu0 %v330
    %v447 = vpop.f32.mrf.mxu0
    %v448 = vadd.f32 0.0, %v447
    %449 = vmatmul.f32.gmra.mxu0 %v331
    %v450 = vpop.f32.mrf.mxu0
    %v451 = vadd.f32 0.0, %v450
    %452 = vmatmul.f32.gmra.mxu0 %v332
    %v453 = vpop.f32.mrf.mxu0
    %v454 = vadd.f32 0.0, %v453
    %455 = vmatmul.f32.gmra.mxu0 %v333
    %v456 = vpop.f32.mrf.mxu0
    %v457 = vadd.f32 0.0, %v456
    %458 = vmatmul.f32.gmra.mxu0 %v334
    %v459 = vpop.f32.mrf.mxu0
    %v460 = vadd.f32 0.0, %v459
    %461 = vmatmul.f32.gmra.mxu0 %v335
    %v462 = vpop.f32.mrf.mxu0
    %v463 = vadd.f32 0.0, %v462
    %464 = vdwg.mxu0
    %s465 = smul.u32 0, 256
    %v466 = vlaneseq
    %v467 = vshrl.u32 %v466, 7
    %v468 = vadd.s32 %v467, 8
    %v469 = vadd.s32 %v467, 16
    %v470 = vadd.s32 %v467, 24
    %v471 = vadd.s32 %v467, 32
    %v472 = vadd.s32 %v467, 40
    %v473 = vadd.s32 %v467, 48
    %v474 = vadd.s32 %v467, 56
    %v475 = vadd.s32 %v467, 64
    %v476 = vadd.s32 %v467, 72
    %v477 = vadd.s32 %v467, 80
    %v478 = vadd.s32 %v467, 88
    %v479 = vadd.s32 %v467, 96
    %v480 = vadd.s32 %v467, 104
    %v481 = vadd.s32 %v467, 112
    %v482 = vadd.s32 %v467, 120
    %v483 = vadd.s32 %v467, 128
    %v484 = vadd.s32 %v467, 136
    %v485 = vadd.s32 %v467, 144
    %v486 = vadd.s32 %v467, 152
    %v487 = vadd.s32 %v467, 160
    %v488 = vadd.s32 %v467, 168
    %v489 = vadd.s32 %v467, 176
    %v490 = vadd.s32 %v467, 184
    %v491 = vadd.s32 %v467, 192
    %v492 = vadd.s32 %v467, 200
    %v493 = vadd.s32 %v467, 208
    %v494 = vadd.s32 %v467, 216
    %v495 = vadd.s32 %v467, 224
    %v496 = vadd.s32 %v467, 232
    %v497 = vadd.s32 %v467, 240
    %v498 = vadd.s32 %v467, 248
    %v499 = vstv %s465
    %v500 = vadd.s32 %v499, %v467
    %v501 = vadd.s32 %v499, %v468
    %v502 = vadd.s32 %v499, %v469
    %v503 = vadd.s32 %v499, %v470
    %v504 = vadd.s32 %v499, %v471
    %v505 = vadd.s32 %v499, %v472
    %v506 = vadd.s32 %v499, %v473
    %v507 = vadd.s32 %v499, %v474
    %v508 = vadd.s32 %v499, %v475
    %v509 = vadd.s32 %v499, %v476
    %v510 = vadd.s32 %v499, %v477
    %v511 = vadd.s32 %v499, %v478
    %v512 = vadd.s32 %v499, %v479
    %v513 = vadd.s32 %v499, %v480
    %v514 = vadd.s32 %v499, %v481
    %v515 = vadd.s32 %v499, %v482
    %v516 = vadd.s32 %v499, %v483
    %v517 = vadd.s32 %v499, %v484
    %v518 = vadd.s32 %v499, %v485
    %v519 = vadd.s32 %v499, %v486
    %v520 = vadd.s32 %v499, %v487
    %v521 = vadd.s32 %v499, %v488
    %v522 = vadd.s32 %v499, %v489
    %v523 = vadd.s32 %v499, %v490
    %v524 = vadd.s32 %v499, %v491
    %v525 = vadd.s32 %v499, %v492
    %v526 = vadd.s32 %v499, %v493
    %v527 = vadd.s32 %v499, %v494
    %v528 = vadd.s32 %v499, %v495
    %v529 = vadd.s32 %v499, %v496
    %v530 = vadd.s32 %v499, %v497
    %v531 = vadd.s32 %v499, %v498
    %vm532 = vcmp.lt.s32.totalorder %v500, 200
    %vm533 = vcmp.lt.s32.totalorder %v501, 200
    %vm534 = vcmp.lt.s32.totalorder %v502, 200
    %vm535 = vcmp.lt.s32.totalorder %v503, 200
    %vm536 = vcmp.lt.s32.totalorder %v504, 200
    %vm537 = vcmp.lt.s32.totalorder %v505, 200
    %vm538 = vcmp.lt.s32.totalorder %v506, 200
    %vm539 = vcmp.lt.s32.totalorder %v507, 200
    %vm540 = vcmp.lt.s32.totalorder %v508, 200
    %vm541 = vcmp.lt.s32.totalorder %v509, 200
    %vm542 = vcmp.lt.s32.totalorder %v510, 200
    %vm543 = vcmp.lt.s32.totalorder %v511, 200
    %vm544 = vcmp.lt.s32.totalorder %v512, 200
    %vm545 = vcmp.lt.s32.totalorder %v513, 200
    %vm546 = vcmp.lt.s32.totalorder %v514, 200
    %vm547 = vcmp.lt.s32.totalorder %v515, 200
    %vm548 = vcmp.lt.s32.totalorder %v516, 200
    %vm549 = vcmp.lt.s32.totalorder %v517, 200
    %vm550 = vcmp.lt.s32.totalorder %v518, 200
    %vm551 = vcmp.lt.s32.totalorder %v519, 200
    %vm552 = vcmp.lt.s32.totalorder %v520, 200
    %vm553 = vcmp.lt.s32.totalorder %v521, 200
    %vm554 = vcmp.lt.s32.totalorder %v522, 200
    %vm555 = vcmp.lt.s32.totalorder %v523, 200
    %vm556 = vcmp.lt.s32.totalorder %v524, 200
    %vm557 = vcmp.lt.s32.totalorder %v525, 200
    %vm558 = vcmp.lt.s32.totalorder %v526, 200
    %vm559 = vcmp.lt.s32.totalorder %v527, 200
    %vm560 = vcmp.lt.s32.totalorder %v528, 200
    %vm561 = vcmp.lt.s32.totalorder %v529, 200
    %vm562 = vcmp.lt.s32.totalorder %v530, 200
    %vm563 = vcmp.lt.s32.totalorder %v531, 200
    %v564 = vsel %vm532, 1, 0
    %v565 = vsel %vm533, 1, 0
    %v566 = vsel %vm534, 1, 0
    %v567 = vsel %vm535, 1, 0
    %v568 = vsel %vm536, 1, 0
    %v569 = vsel %vm537, 1, 0
    %v570 = vsel %vm538, 1, 0
    %v571 = vsel %vm539, 1, 0
    %v572 = vsel %vm540, 1, 0
    %v573 = vsel %vm541, 1, 0
    %v574 = vsel %vm542, 1, 0
    %v575 = vsel %vm543, 1, 0
    %v576 = vsel %vm544, 1, 0
    %v577 = vsel %vm545, 1, 0
    %v578 = vsel %vm546, 1, 0
    %v579 = vsel %vm547, 1, 0
    %v580 = vsel %vm548, 1, 0
    %v581 = vsel %vm549, 1, 0
    %v582 = vsel %vm550, 1, 0
    %v583 = vsel %vm551, 1, 0
    %v584 = vsel %vm552, 1, 0
    %v585 = vsel %vm553, 1, 0
    %v586 = vsel %vm554, 1, 0
    %v587 = vsel %vm555, 1, 0
    %v588 = vsel %vm556, 1, 0
    %v589 = vsel %vm557, 1, 0
    %v590 = vsel %vm558, 1, 0
    %v591 = vsel %vm559, 1, 0
    %v592 = vsel %vm560, 1, 0
    %v593 = vsel %vm561, 1, 0
    %v594 = vsel %vm562, 1, 0
    %v595 = vsel %vm563, 1, 0
    %vm596 = vcmp.eq.s32.totalorder %v564, 1
    %vm597 = vcmp.eq.s32.totalorder %v565, 1
    %vm598 = vcmp.eq.s32.totalorder %v566, 1
    %vm599 = vcmp.eq.s32.totalorder %v567, 1
    %vm600 = vcmp.eq.s32.totalorder %v568, 1
    %vm601 = vcmp.eq.s32.totalorder %v569, 1
    %vm602 = vcmp.eq.s32.totalorder %v570, 1
    %vm603 = vcmp.eq.s32.totalorder %v571, 1
    %vm604 = vcmp.eq.s32.totalorder %v572, 1
    %vm605 = vcmp.eq.s32.totalorder %v573, 1
    %vm606 = vcmp.eq.s32.totalorder %v574, 1
    %vm607 = vcmp.eq.s32.totalorder %v575, 1
    %vm608 = vcmp.eq.s32.totalorder %v576, 1
    %vm609 = vcmp.eq.s32.totalorder %v577, 1
    %vm610 = vcmp.eq.s32.totalorder %v578, 1
    %vm611 = vcmp.eq.s32.totalorder %v579, 1
    %vm612 = vcmp.eq.s32.totalorder %v580, 1
    %vm613 = vcmp.eq.s32.totalorder %v581, 1
    %vm614 = vcmp.eq.s32.totalorder %v582, 1
    %vm615 = vcmp.eq.s32.totalorder %v583, 1
    %vm616 = vcmp.eq.s32.totalorder %v584, 1
    %vm617 = vcmp.eq.s32.totalorder %v585, 1
    %vm618 = vcmp.eq.s32.totalorder %v586, 1
    %vm619 = vcmp.eq.s32.totalorder %v587, 1
    %vm620 = vcmp.eq.s32.totalorder %v588, 1
    %vm621 = vcmp.eq.s32.totalorder %v589, 1
    %vm622 = vcmp.eq.s32.totalorder %v590, 1
    %vm623 = vcmp.eq.s32.totalorder %v591, 1
    %vm624 = vcmp.eq.s32.totalorder %v592, 1
    %vm625 = vcmp.eq.s32.totalorder %v593, 1
    %vm626 = vcmp.eq.s32.totalorder %v594, 1
    %vm627 = vcmp.eq.s32.totalorder %v595, 1
    %v628 = vsel %vm596, %v370, 0.0
    %v629 = vsel %vm597, %v373, 0.0
    %v630 = vsel %vm598, %v376, 0.0
    %v631 = vsel %vm599, %v379, 0.0
    %v632 = vsel %vm600, %v382, 0.0
    %v633 = vsel %vm601, %v385, 0.0
    %v634 = vsel %vm602, %v388, 0.0
    %v635 = vsel %vm603, %v391, 0.0
    %v636 = vsel %vm604, %v394, 0.0
    %v637 = vsel %vm605, %v397, 0.0
    %v638 = vsel %vm606, %v400, 0.0
    %v639 = vsel %vm607, %v403, 0.0
    %v640 = vsel %vm608, %v406, 0.0
    %v641 = vsel %vm609, %v409, 0.0
    %v642 = vsel %vm610, %v412, 0.0
    %v643 = vsel %vm611, %v415, 0.0
    %v644 = vsel %vm612, %v418, 0.0
    %v645 = vsel %vm613, %v421, 0.0
    %v646 = vsel %vm614, %v424, 0.0
    %v647 = vsel %vm615, %v427, 0.0
    %v648 = vsel %vm616, %v430, 0.0
    %v649 = vsel %vm617, %v433, 0.0
    %v650 = vsel %vm618, %v436, 0.0
    %v651 = vsel %vm619, %v439, 0.0
    %v652 = vsel %vm620, %v442, 0.0
    %v653 = vsel %vm621, %v445, 0.0
    %v654 = vsel %vm622, %v448, 0.0
    %v655 = vsel %vm623, %v451, 0.0
    %v656 = vsel %vm624, %v454, 0.0
    %v657 = vsel %vm625, %v457, 0.0
    %v658 = vsel %vm626, %v460, 0.0
    %v659 = vsel %vm627, %v463, 0.0
    %v660 = vpack.c.bf16 %v628, %v628
    %v661 = vpack.c.bf16 %v629, %v629
    %v662 = vpack.c.bf16 %v630, %v630
    %v663 = vpack.c.bf16 %v631, %v631
    %v664 = vpack.c.bf16 %v632, %v632
    %v665 = vpack.c.bf16 %v633, %v633
    %v666 = vpack.c.bf16 %v634, %v634
    %v667 = vpack.c.bf16 %v635, %v635
    %v668 = vpack.c.bf16 %v636, %v636
    %v669 = vpack.c.bf16 %v637, %v637
    %v670 = vpack.c.bf16 %v638, %v638
    %v671 = vpack.c.bf16 %v639, %v639
    %v672 = vpack.c.bf16 %v640, %v640
    %v673 = vpack.c.bf16 %v641, %v641
    %v674 = vpack.c.bf16 %v642, %v642
    %v675 = vpack.c.bf16 %v643, %v643
    %v676 = vpack.c.bf16 %v644, %v644
    %v677 = vpack.c.bf16 %v645, %v645
    %v678 = vpack.c.bf16 %v646, %v646
    %v679 = vpack.c.bf16 %v647, %v647
    %v680 = vpack.c.bf16 %v648, %v648
    %v681 = vpack.c.bf16 %v649, %v649
    %v682 = vpack.c.bf16 %v650, %v650
    %v683 = vpack.c.bf16 %v651, %v651
    %v684 = vpack.c.bf16 %v652, %v652
    %v685 = vpack.c.bf16 %v653, %v653
    %v686 = vpack.c.bf16 %v654, %v654
    %v687 = vpack.c.bf16 %v655, %v655
    %v688 = vpack.c.bf16 %v656, %v656
    %v689 = vpack.c.bf16 %v657, %v657
    %v690 = vpack.c.bf16 %v658, %v658
    %v691 = vpack.c.bf16 %v659, %v659
    %692 = vst [vmem:[#allocation12] sm:$0xf] %v660
    %693 = vst [vmem:[#allocation12 + $0x4] sm:$0xf] %v661
    %694 = vst [vmem:[#allocation12 + $0x8] sm:$0xf] %v662
    %695 = vst [vmem:[#allocation12 + $0xc] sm:$0xf] %v663
    %696 = vst [vmem:[#allocation12 + $0x10] sm:$0xf] %v664
    %697 = vst [vmem:[#allocation12 + $0x14] sm:$0xf] %v665
    %698 = vst [vmem:[#allocation12 + $0x18] sm:$0xf] %v666
    %699 = vst [vmem:[#allocation12 + $0x1c] sm:$0xf] %v667
    %700 = vst [vmem:[#allocation12 + $0x20] sm:$0xf] %v668
    %701 = vst [vmem:[#allocation12 + $0x24] sm:$0xf] %v669
    %702 = vst [vmem:[#allocation12 + $0x28] sm:$0xf] %v670
    %703 = vst [vmem:[#allocation12 + $0x2c] sm:$0xf] %v671
    %704 = vst [vmem:[#allocation12 + $0x30] sm:$0xf] %v672
    %705 = vst [vmem:[#allocation12 + $0x34] sm:$0xf] %v673
    %706 = vst [vmem:[#allocation12 + $0x38] sm:$0xf] %v674
    %707 = vst [vmem:[#allocation12 + $0x3c] sm:$0xf] %v675
    %708 = vst [vmem:[#allocation12 + $0x40] sm:$0xf] %v676
    %709 = vst [vmem:[#allocation12 + $0x44] sm:$0xf] %v677
    %710 = vst [vmem:[#allocation12 + $0x48] sm:$0xf] %v678
    %711 = vst [vmem:[#allocation12 + $0x4c] sm:$0xf] %v679
    %712 = vst [vmem:[#allocation12 + $0x50] sm:$0xf] %v680
    %713 = vst [vmem:[#allocation12 + $0x54] sm:$0xf] %v681
    %714 = vst [vmem:[#allocation12 + $0x58] sm:$0xf] %v682
    %715 = vst [vmem:[#allocation12 + $0x5c] sm:$0xf] %v683
    %716 = vst [vmem:[#allocation12 + $0x60] sm:$0xf] %v684
    %717 = vst [vmem:[#allocation12 + $0x64] sm:$0xf] %v685
    %718 = vst [vmem:[#allocation12 + $0x68] sm:$0xf] %v686
    %719 = vst [vmem:[#allocation12 + $0x6c] sm:$0xf] %v687
    %720 = vst [vmem:[#allocation12 + $0x70] sm:$0xf] %v688
    %721 = vst [vmem:[#allocation12 + $0x74] sm:$0xf] %v689
    %722 = vst [vmem:[#allocation12 + $0x78] sm:$0xf] %v690
    %723 = vst [vmem:[#allocation12 + $0x7c] sm:$0xf] %v691
    %v724 = vld [vmem:[%s4] sm:$0x1]
    %v726 = vperm.slane %v724, 0
    %v728 = vmul.f32 %v628, %v726
    %v729 = vmul.f32 %v629, %v726
    %v730 = vmul.f32 %v630, %v726
    %v731 = vmul.f32 %v631, %v726
    %v732 = vmul.f32 %v632, %v726
    %v733 = vmul.f32 %v633, %v726
    %v734 = vmul.f32 %v634, %v726
    %v735 = vmul.f32 %v635, %v726
    %v736 = vmul.f32 %v636, %v726
    %v737 = vmul.f32 %v637, %v726
    %v738 = vmul.f32 %v638, %v726
    %v739 = vmul.f32 %v639, %v726
    %v740 = vmul.f32 %v640, %v726
    %v741 = vmul.f32 %v641, %v726
    %v742 = vmul.f32 %v642, %v726
    %v743 = vmul.f32 %v643, %v726
    %v744 = vmul.f32 %v644, %v726
    %v745 = vmul.f32 %v645, %v726
    %v746 = vmul.f32 %v646, %v726
    %v747 = vmul.f32 %v647, %v726
    %v748 = vmul.f32 %v648, %v726
    %v749 = vmul.f32 %v649, %v726
    %v750 = vmul.f32 %v650, %v726
    %v751 = vmul.f32 %v651, %v726
    %v752 = vmul.f32 %v652, %v726
    %v753 = vmul.f32 %v653, %v726
    %v754 = vmul.f32 %v654, %v726
    %v755 = vmul.f32 %v655, %v726
    %v756 = vmul.f32 %v656, %v726
    %v757 = vmul.f32 %v657, %v726
    %v758 = vmul.f32 %v658, %v726
    %v759 = vmul.f32 %v659, %v726
    %760 = vadd.xlane.f32.xlu0 %v728
    %v761 = vpop.xlane.xlu0 %760
    %762 = vadd.xlane.f32.xlu0 %v729
    %v763 = vpop.xlane.xlu0 %762
    %764 = vadd.xlane.f32.xlu0 %v730
    %v765 = vpop.xlane.xlu0 %764
    %766 = vadd.xlane.f32.xlu0 %v731
    %v767 = vpop.xlane.xlu0 %766
    %768 = vadd.xlane.f32.xlu0 %v732
    %v769 = vpop.xlane.xlu0 %768
    %770 = vadd.xlane.f32.xlu0 %v733
    %v771 = vpop.xlane.xlu0 %770
    %772 = vadd.xlane.f32.xlu0 %v734
    %v773 = vpop.xlane.xlu0 %772
    %774 = vadd.xlane.f32.xlu0 %v735
    %v775 = vpop.xlane.xlu0 %774
    %776 = vadd.xlane.f32.xlu0 %v736
    %v777 = vpop.xlane.xlu0 %776
    %778 = vadd.xlane.f32.xlu0 %v737
    %v779 = vpop.xlane.xlu0 %778
    %780 = vadd.xlane.f32.xlu0 %v738
    %v781 = vpop.xlane.xlu0 %780
    %782 = vadd.xlane.f32.xlu0 %v739
    %v783 = vpop.xlane.xlu0 %782
    %784 = vadd.xlane.f32.xlu0 %v740
    %v785 = vpop.xlane.xlu0 %784
    %786 = vadd.xlane.f32.xlu0 %v741
    %v787 = vpop.xlane.xlu0 %786
    %788 = vadd.xlane.f32.xlu0 %v742
    %v789 = vpop.xlane.xlu0 %788
    %790 = vadd.xlane.f32.xlu0 %v743
    %v791 = vpop.xlane.xlu0 %790
    %792 = vadd.xlane.f32.xlu0 %v744
    %v793 = vpop.xlane.xlu0 %792
    %794 = vadd.xlane.f32.xlu0 %v745
    %v795 = vpop.xlane.xlu0 %794
    %796 = vadd.xlane.f32.xlu0 %v746
    %v797 = vpop.xlane.xlu0 %796
    %798 = vadd.xlane.f32.xlu0 %v747
    %v799 = vpop.xlane.xlu0 %798
    %800 = vadd.xlane.f32.xlu0 %v748
    %v801 = vpop.xlane.xlu0 %800
    %802 = vadd.xlane.f32.xlu0 %v749
    %v803 = vpop.xlane.xlu0 %802
    %804 = vadd.xlane.f32.xlu0 %v750
    %v805 = vpop.xlane.xlu0 %804
    %806 = vadd.xlane.f32.xlu0 %v751
    %v807 = vpop.xlane.xlu0 %806
    %808 = vadd.xlane.f32.xlu0 %v752
    %v809 = vpop.xlane.xlu0 %808
    %810 = vadd.xlane.f32.xlu0 %v753
    %v811 = vpop.xlane.xlu0 %810
    %812 = vadd.xlane.f32.xlu0 %v754
    %v813 = vpop.xlane.xlu0 %812
    %814 = vadd.xlane.f32.xlu0 %v755
    %v815 = vpop.xlane.xlu0 %814
    %816 = vadd.xlane.f32.xlu0 %v756
    %v817 = vpop.xlane.xlu0 %816
    %818 = vadd.xlane.f32.xlu0 %v757
    %v819 = vpop.xlane.xlu0 %818
    %820 = vadd.xlane.f32.xlu0 %v758
    %v821 = vpop.xlane.xlu0 %820
    %822 = vadd.xlane.f32.xlu0 %v759
    %v823 = vpop.xlane.xlu0 %822
    %vm824 = vcmask 7168
    %825 = vst.msk [vmem:[%s11] sm:$0xff] %vm824, %v761
    %826 = vst.msk [vmem:[%s11 + $0x8] sm:$0xff] %vm824, %v763
    %827 = vst.msk [vmem:[%s11 + $0x10] sm:$0xff] %vm824, %v765
    %828 = vst.msk [vmem:[%s11 + $0x18] sm:$0xff] %vm824, %v767
    %829 = vst.msk [vmem:[%s11 + $0x20] sm:$0xff] %vm824, %v769
    %830 = vst.msk [vmem:[%s11 + $0x28] sm:$0xff] %vm824, %v771
    %831 = vst.msk [vmem:[%s11 + $0x30] sm:$0xff] %vm824, %v773
    %832 = vst.msk [vmem:[%s11 + $0x38] sm:$0xff] %vm824, %v775
    %833 = vst.msk [vmem:[%s11 + $0x40] sm:$0xff] %vm824, %v777
    %834 = vst.msk [vmem:[%s11 + $0x48] sm:$0xff] %vm824, %v779
    %835 = vst.msk [vmem:[%s11 + $0x50] sm:$0xff] %vm824, %v781
    %836 = vst.msk [vmem:[%s11 + $0x58] sm:$0xff] %vm824, %v783
    %837 = vst.msk [vmem:[%s11 + $0x60] sm:$0xff] %vm824, %v785
    %838 = vst.msk [vmem:[%s11 + $0x68] sm:$0xff] %vm824, %v787
    %839 = vst.msk [vmem:[%s11 + $0x70] sm:$0xff] %vm824, %v789
    %840 = vst.msk [vmem:[%s11 + $0x78] sm:$0xff] %vm824, %v791
    %841 = vst.msk [vmem:[%s11 + $0x80] sm:$0xff] %vm824, %v793
    %842 = vst.msk [vmem:[%s11 + $0x88] sm:$0xff] %vm824, %v795
    %843 = vst.msk [vmem:[%s11 + $0x90] sm:$0xff] %vm824, %v797
    %844 = vst.msk [vmem:[%s11 + $0x98] sm:$0xff] %vm824, %v799
    %845 = vst.msk [vmem:[%s11 + $0xa0] sm:$0xff] %vm824, %v801
    %846 = vst.msk [vmem:[%s11 + $0xa8] sm:$0xff] %vm824, %v803
    %847 = vst.msk [vmem:[%s11 + $0xb0] sm:$0xff] %vm824, %v805
    %848 = vst.msk [vmem:[%s11 + $0xb8] sm:$0xff] %vm824, %v807
    %849 = vst.msk [vmem:[%s11 + $0xc0] sm:$0xff] %vm824, %v809
    %850 = vst.msk [vmem:[%s11 + $0xc8] sm:$0xff] %vm824, %v811
    %851 = vst.msk [vmem:[%s11 + $0xd0] sm:$0xff] %vm824, %v813
    %852 = vst.msk [vmem:[%s11 + $0xd8] sm:$0xff] %vm824, %v815
    %853 = vst.msk [vmem:[%s11 + $0xe0] sm:$0xff] %vm824, %v817
    %854 = vst.msk [vmem:[%s11 + $0xe8] sm:$0xff] %vm824, %v819
    %855 = vst.msk [vmem:[%s11 + $0xf0] sm:$0xff] %vm824, %v821
    %856 = vst.msk [vmem:[%s11 + $0xf8] sm:$0xff] %vm824, %v823
    %v857 = vld [vmem:[%s5] sm:$0x1]
    %858 = vmatpush.xpose.msra.mxu0 %v643
    %859 = vmatpush.xpose.msra.mxu0 %v642
    %860 = vmatpush.xpose.msra.mxu0 %v641
    %861 = vmatpush.xpose.msra.mxu0 %v640
    %862 = vmatpush.xpose.msra.mxu0 %v639
    %863 = vmatpush.xpose.msra.mxu0 %v638
    %864 = vmatpush.xpose.msra.mxu0 %v637
    %865 = vmatpush.xpose.msra.mxu0 %v636
    %866 = vmatpush.xpose.msra.mxu0 %v635
    %867 = vmatpush.xpose.msra.mxu0 %v634
    %868 = vmatpush.xpose.msra.mxu0 %v633
    %869 = vmatpush.xpose.msra.mxu0 %v632
    %870 = vmatpush.xpose.msra.mxu0 %v631
    %871 = vmatpush.xpose.msra.mxu0 %v630
    %872 = vmatpush.xpose.msra.mxu0 %v629
    %873 = vmatpush.xpose.msra.mxu0 %v628
    %874 = vmatmul.f32.gmra.mxu0 %v857
    %v875 = vpop.f32.mrf.mxu0
    %v876 = vadd.f32 0.0, %v875
    %877 = vdwg.mxu0
    %878 = vmatpush.xpose.msra.mxu0 %v659
    %879 = vmatpush.xpose.msra.mxu0 %v658
    %880 = vmatpush.xpose.msra.mxu0 %v657
    %881 = vmatpush.xpose.msra.mxu0 %v656
    %882 = vmatpush.xpose.msra.mxu0 %v655
    %883 = vmatpush.xpose.msra.mxu0 %v654
    %884 = vmatpush.xpose.msra.mxu0 %v653
    %885 = vmatpush.xpose.msra.mxu0 %v652
    %886 = vmatpush.xpose.msra.mxu0 %v651
    %887 = vmatpush.xpose.msra.mxu0 %v650
    %888 = vmatpush.xpose.msra.mxu0 %v649
    %889 = vmatpush.xpose.msra.mxu0 %v648
    %890 = vmatpush.xpose.msra.mxu0 %v647
    %891 = vmatpush.xpose.msra.mxu0 %v646
    %892 = vmatpush.xpose.msra.mxu0 %v645
    %893 = vmatpush.xpose.msra.mxu0 %v644
    %894 = vmatmul.f32.gmra.mxu0 %v857
    %v895 = vpop.f32.mrf.mxu0
    %v896 = vadd.f32 0.0, %v895
    %897 = vdwg.mxu0
    %v900 = vrot.slane %v896, 7
    %vm901 = vcmask 1040384
    %v902 = vsel %vm901, %v876, %v900
    %v904 = vlaneseq
    %vm905 = vcmp.ge.s32.totalorder %v904, 0
    %vm906 = vcmp.lt.s32.totalorder %v904, 256
    %vm907 = vmand %vm905, %vm906
    %908 = vst.msk [vmem:[#allocation13] sm:$0x3] %vm907, %v902
    %v909 = vld [vmem:[#allocation2] sm:$0xff]
    %v910 = vld [vmem:[#allocation2 + $0x8] sm:$0xff]
    %v911 = vld [vmem:[#allocation2 + $0x10] sm:$0xff]
    %v912 = vld [vmem:[#allocation2 + $0x18] sm:$0xff]
    %v913 = vld [vmem:[#allocation2 + $0x20] sm:$0xff]
    %v914 = vld [vmem:[#allocation2 + $0x28] sm:$0xff]
    %v915 = vld [vmem:[#allocation2 + $0x30] sm:$0xff]
    %v916 = vld [vmem:[#allocation2 + $0x38] sm:$0xff]
    %v917 = vld [vmem:[#allocation2 + $0x40] sm:$0xff]
    %v918 = vld [vmem:[#allocation2 + $0x48] sm:$0xff]
    %v919 = vld [vmem:[#allocation2 + $0x50] sm:$0xff]
    %v920 = vld [vmem:[#allocation2 + $0x58] sm:$0xff]
    %v921 = vld [vmem:[#allocation2 + $0x60] sm:$0xff]
    %v922 = vld [vmem:[#allocation2 + $0x68] sm:$0xff]
    %v923 = vld [vmem:[#allocation2 + $0x70] sm:$0xff]
    %v924 = vld [vmem:[#allocation2 + $0x78] sm:$0xff]
    %v925 = vld [vmem:[#allocation9] sm:$0xff]
    %v926 = vld [vmem:[#allocation9 + $0x8] sm:$0xff]
    %v927 = vld [vmem:[#allocation9 + $0x10] sm:$0xff]
    %v928 = vld [vmem:[#allocation9 + $0x18] sm:$0xff]
    %v929 = vld [vmem:[#allocation9 + $0x20] sm:$0xff]
    %v930 = vld [vmem:[#allocation9 + $0x28] sm:$0xff]
    %v931 = vld [vmem:[#allocation9 + $0x30] sm:$0xff]
    %v932 = vld [vmem:[#allocation9 + $0x38] sm:$0xff]
    %v933 = vld [vmem:[#allocation9 + $0x40] sm:$0xff]
    %v934 = vld [vmem:[#allocation9 + $0x48] sm:$0xff]
    %v935 = vld [vmem:[#allocation9 + $0x50] sm:$0xff]
    %v936 = vld [vmem:[#allocation9 + $0x58] sm:$0xff]
    %v937 = vld [vmem:[#allocation9 + $0x60] sm:$0xff]
    %v938 = vld [vmem:[#allocation9 + $0x68] sm:$0xff]
    %v939 = vld [vmem:[#allocation9 + $0x70] sm:$0xff]
    %v940 = vld [vmem:[#allocation9 + $0x78] sm:$0xff]
    %v941 = vld [vmem:[#allocation9 + $0x80] sm:$0xff]
    %v942 = vld [vmem:[#allocation9 + $0x88] sm:$0xff]
    %v943 = vld [vmem:[#allocation9 + $0x90] sm:$0xff]
    %v944 = vld [vmem:[#allocation9 + $0x98] sm:$0xff]
    %v945 = vld [vmem:[#allocation9 + $0xa0] sm:$0xff]
    %v946 = vld [vmem:[#allocation9 + $0xa8] sm:$0xff]
    %v947 = vld [vmem:[#allocation9 + $0xb0] sm:$0xff]
    %v948 = vld [vmem:[#allocation9 + $0xb8] sm:$0xff]
    %v949 = vld [vmem:[#allocation9 + $0xc0] sm:$0xff]
    %v950 = vld [vmem:[#allocation9 + $0xc8] sm:$0xff]
    %v951 = vld [vmem:[#allocation9 + $0xd0] sm:$0xff]
    %v952 = vld [vmem:[#allocation9 + $0xd8] sm:$0xff]
    %v953 = vld [vmem:[#allocation9 + $0xe0] sm:$0xff]
    %v954 = vld [vmem:[#allocation9 + $0xe8] sm:$0xff]
    %v955 = vld [vmem:[#allocation9 + $0xf0] sm:$0xff]
    %v956 = vld [vmem:[#allocation9 + $0xf8] sm:$0xff]
    %957 = vxpose.xlu0.b32.start [1/16] %v139, 128
    %958 = vxpose.xlu0.b32.cont [2/16] %v140, 128
    %959 = vxpose.xlu0.b32.cont [3/16] %v141, 128
    %960 = vxpose.xlu0.b32.cont [4/16] %v142, 128
    %961 = vxpose.xlu0.b32.cont [5/16] %v143, 128
    %962 = vxpose.xlu0.b32.cont [6/16] %v144, 128
    %963 = vxpose.xlu0.b32.cont [7/16] %v145, 128
    %964 = vxpose.xlu0.b32.cont [8/16] %v146, 128
    %965 = vxpose.xlu0.b32.cont [9/16] %v147, 128
    %966 = vxpose.xlu0.b32.cont [10/16] %v148, 128
    %967 = vxpose.xlu0.b32.cont [11/16] %v149, 128
    %968 = vxpose.xlu0.b32.cont [12/16] %v150, 128
    %969 = vxpose.xlu0.b32.cont [13/16] %v151, 128
    %970 = vxpose.xlu0.b32.cont [14/16] %v152, 128
    %971 = vxpose.xlu0.b32.cont [15/16] %v153, 128
    %972 = vxpose.xlu0.b32.end [16/16] %v154, 128
    %v973 = vpop.trf.xlu0
    %v974 = vpop.trf.xlu0
    %v975 = vpop.trf.xlu0
    %v976 = vpop.trf.xlu0
    %v977 = vpop.trf.xlu0
    %v978 = vpop.trf.xlu0
    %v979 = vpop.trf.xlu0
    %v980 = vpop.trf.xlu0
    %v981 = vpop.trf.xlu0
    %v982 = vpop.trf.xlu0
    %v983 = vpop.trf.xlu0
    %v984 = vpop.trf.xlu0
    %v985 = vpop.trf.xlu0
    %v986 = vpop.trf.xlu0
    %v987 = vpop.trf.xlu0
    %v988 = vpop.trf.xlu0
    %989 = vxpose.xlu0.b32.start [1/16] %v155, 128
    %990 = vxpose.xlu0.b32.cont [2/16] %v156, 128
    %991 = vxpose.xlu0.b32.cont [3/16] %v157, 128
    %992 = vxpose.xlu0.b32.cont [4/16] %v158, 128
    %993 = vxpose.xlu0.b32.cont [5/16] %v159, 128
    %994 = vxpose.xlu0.b32.cont [6/16] %v160, 128
    %995 = vxpose.xlu0.b32.cont [7/16] %v161, 128
    %996 = vxpose.xlu0.b32.cont [8/16] %v162, 128
    %997 = vxpose.xlu0.b32.cont [9/16] %v163, 128
    %998 = vxpose.xlu0.b32.cont [10/16] %v164, 128
    %999 = vxpose.xlu0.b32.cont [11/16] %v165, 128
    %1000 = vxpose.xlu0.b32.cont [12/16] %v166, 128
    %1001 = vxpose.xlu0.b32.cont [13/16] %v167, 128
    %1002 = vxpose.xlu0.b32.cont [14/16] %v168, 128
    %1003 = vxpose.xlu0.b32.cont [15/16] %v169, 128
    %1004 = vxpose.xlu0.b32.end [16/16] %v170, 128
    %v1005 = vpop.trf.xlu0
    %v1006 = vpop.trf.xlu0
    %v1007 = vpop.trf.xlu0
    %v1008 = vpop.trf.xlu0
    %v1009 = vpop.trf.xlu0
    %v1010 = vpop.trf.xlu0
    %v1011 = vpop.trf.xlu0
    %v1012 = vpop.trf.xlu0
    %v1013 = vpop.trf.xlu0
    %v1014 = vpop.trf.xlu0
    %v1015 = vpop.trf.xlu0
    %v1016 = vpop.trf.xlu0
    %v1017 = vpop.trf.xlu0
    %v1018 = vpop.trf.xlu0
    %v1019 = vpop.trf.xlu0
    %v1020 = vpop.trf.xlu0
    %1021 = vmatpush.msra.mxu0 %v940
    %1022 = vmatpush.msra.mxu0 %v939
    %1023 = vmatpush.msra.mxu0 %v938
    %1024 = vmatpush.msra.mxu0 %v937
    %1025 = vmatpush.msra.mxu0 %v936
    %1026 = vmatpush.msra.mxu0 %v935
    %1027 = vmatpush.msra.mxu0 %v934
    %1028 = vmatpush.msra.mxu0 %v933
    %1029 = vmatpush.msra.mxu0 %v932
    %1030 = vmatpush.msra.mxu0 %v931
    %1031 = vmatpush.msra.mxu0 %v930
    %1032 = vmatpush.msra.mxu0 %v929
    %1033 = vmatpush.msra.mxu0 %v928
    %1034 = vmatpush.msra.mxu0 %v927
    %1035 = vmatpush.msra.mxu0 %v926
    %1036 = vmatpush.msra.mxu0 %v925
    %1037 = vmatmul.f32.gmra.mxu0 %v973
    %v1038 = vpop.f32.mrf.mxu0
    %v1039 = vadd.f32 0.0, %v1038
    %1040 = vmatmul.f32.gmra.mxu0 %v974
    %v1041 = vpop.f32.mrf.mxu0
    %v1042 = vadd.f32 0.0, %v1041
    %1043 = vmatmul.f32.gmra.mxu0 %v975
    %v1044 = vpop.f32.mrf.mxu0
    %v1045 = vadd.f32 0.0, %v1044
    %1046 = vmatmul.f32.gmra.mxu0 %v976
    %v1047 = vpop.f32.mrf.mxu0
    %v1048 = vadd.f32 0.0, %v1047
    %1049 = vmatmul.f32.gmra.mxu0 %v977
    %v1050 = vpop.f32.mrf.mxu0
    %v1051 = vadd.f32 0.0, %v1050
    %1052 = vmatmul.f32.gmra.mxu0 %v978
    %v1053 = vpop.f32.mrf.mxu0
    %v1054 = vadd.f32 0.0, %v1053
    %1055 = vmatmul.f32.gmra.mxu0 %v979
    %v1056 = vpop.f32.mrf.mxu0
    %v1057 = vadd.f32 0.0, %v1056
    %1058 = vmatmul.f32.gmra.mxu0 %v980
    %v1059 = vpop.f32.mrf.mxu0
    %v1060 = vadd.f32 0.0, %v1059
    %1061 = vmatmul.f32.gmra.mxu0 %v981
    %v1062 = vpop.f32.mrf.mxu0
    %v1063 = vadd.f32 0.0, %v1062
    %1064 = vmatmul.f32.gmra.mxu0 %v982
    %v1065 = vpop.f32.mrf.mxu0
    %v1066 = vadd.f32 0.0, %v1065
    %1067 = vmatmul.f32.gmra.mxu0 %v983
    %v1068 = vpop.f32.mrf.mxu0
    %v1069 = vadd.f32 0.0, %v1068
    %1070 = vmatmul.f32.gmra.mxu0 %v984
    %v1071 = vpop.f32.mrf.mxu0
    %v1072 = vadd.f32 0.0, %v1071
    %1073 = vmatmul.f32.gmra.mxu0 %v985
    %v1074 = vpop.f32.mrf.mxu0
    %v1075 = vadd.f32 0.0, %v1074
    %1076 = vmatmul.f32.gmra.mxu0 %v986
    %v1077 = vpop.f32.mrf.mxu0
    %v1078 = vadd.f32 0.0, %v1077
    %1079 = vmatmul.f32.gmra.mxu0 %v987
    %v1080 = vpop.f32.mrf.mxu0
    %v1081 = vadd.f32 0.0, %v1080
    %1082 = vmatmul.f32.gmra.mxu0 %v988
    %v1083 = vpop.f32.mrf.mxu0
    %v1084 = vadd.f32 0.0, %v1083
    %1085 = vdwg.mxu0
    %1086 = vmatpush.msra.mxu0 %v956
    %1087 = vmatpush.msra.mxu0 %v955
    %1088 = vmatpush.msra.mxu0 %v954
    %1089 = vmatpush.msra.mxu0 %v953
    %1090 = vmatpush.msra.mxu0 %v952
    %1091 = vmatpush.msra.mxu0 %v951
    %1092 = vmatpush.msra.mxu0 %v950
    %1093 = vmatpush.msra.mxu0 %v949
    %1094 = vmatpush.msra.mxu0 %v948
    %1095 = vmatpush.msra.mxu0 %v947
    %1096 = vmatpush.msra.mxu0 %v946
    %1097 = vmatpush.msra.mxu0 %v945
    %1098 = vmatpush.msra.mxu0 %v944
    %1099 = vmatpush.msra.mxu0 %v943
    %1100 = vmatpush.msra.mxu0 %v942
    %1101 = vmatpush.msra.mxu0 %v941
    %1102 = vmatmul.f32.gmra.mxu0 %v1005
    %v1103 = vpop.f32.mrf.mxu0
    %v1104 = vadd.f32 %v1039, %v1103
    %1105 = vmatmul.f32.gmra.mxu0 %v1006
    %v1106 = vpop.f32.mrf.mxu0
    %v1107 = vadd.f32 %v1042, %v1106
    %1108 = vmatmul.f32.gmra.mxu0 %v1007
    %v1109 = vpop.f32.mrf.mxu0
    %v1110 = vadd.f32 %v1045, %v1109
    %1111 = vmatmul.f32.gmra.mxu0 %v1008
    %v1112 = vpop.f32.mrf.mxu0
    %v1113 = vadd.f32 %v1048, %v1112
    %1114 = vmatmul.f32.gmra.mxu0 %v1009
    %v1115 = vpop.f32.mrf.mxu0
    %v1116 = vadd.f32 %v1051, %v1115
    %1117 = vmatmul.f32.gmra.mxu0 %v1010
    %v1118 = vpop.f32.mrf.mxu0
    %v1119 = vadd.f32 %v1054, %v1118
    %1120 = vmatmul.f32.gmra.mxu0 %v1011
    %v1121 = vpop.f32.mrf.mxu0
    %v1122 = vadd.f32 %v1057, %v1121
    %1123 = vmatmul.f32.gmra.mxu0 %v1012
    %v1124 = vpop.f32.mrf.mxu0
    %v1125 = vadd.f32 %v1060, %v1124
    %1126 = vmatmul.f32.gmra.mxu0 %v1013
    %v1127 = vpop.f32.mrf.mxu0
    %v1128 = vadd.f32 %v1063, %v1127
    %1129 = vmatmul.f32.gmra.mxu0 %v1014
    %v1130 = vpop.f32.mrf.mxu0
    %v1131 = vadd.f32 %v1066, %v1130
    %1132 = vmatmul.f32.gmra.mxu0 %v1015
    %v1133 = vpop.f32.mrf.mxu0
    %v1134 = vadd.f32 %v1069, %v1133
    %1135 = vmatmul.f32.gmra.mxu0 %v1016
    %v1136 = vpop.f32.mrf.mxu0
    %v1137 = vadd.f32 %v1072, %v1136
    %1138 = vmatmul.f32.gmra.mxu0 %v1017
    %v1139 = vpop.f32.mrf.mxu0
    %v1140 = vadd.f32 %v1075, %v1139
    %1141 = vmatmul.f32.gmra.mxu0 %v1018
    %v1142 = vpop.f32.mrf.mxu0
    %v1143 = vadd.f32 %v1078, %v1142
    %1144 = vmatmul.f32.gmra.mxu0 %v1019
    %v1145 = vpop.f32.mrf.mxu0
    %v1146 = vadd.f32 %v1081, %v1145
    %1147 = vmatmul.f32.gmra.mxu0 %v1020
    %v1148 = vpop.f32.mrf.mxu0
    %v1149 = vadd.f32 %v1084, %v1148
    %1150 = vdwg.mxu0
    %v1151 = vadd.f32 %v909, %v1104
    %v1152 = vadd.f32 %v910, %v1107
    %v1153 = vadd.f32 %v911, %v1110
    %v1154 = vadd.f32 %v912, %v1113
    %v1155 = vadd.f32 %v913, %v1116
    %v1156 = vadd.f32 %v914, %v1119
    %v1157 = vadd.f32 %v915, %v1122
    %v1158 = vadd.f32 %v916, %v1125
    %v1159 = vadd.f32 %v917, %v1128
    %v1160 = vadd.f32 %v918, %v1131
    %v1161 = vadd.f32 %v919, %v1134
    %v1162 = vadd.f32 %v920, %v1137
    %v1163 = vadd.f32 %v921, %v1140
    %v1164 = vadd.f32 %v922, %v1143
    %v1165 = vadd.f32 %v923, %v1146
    %v1166 = vadd.f32 %v924, %v1149
    %1167 = vst [vmem:[#allocation2] sm:$0xff] %v1151
    %1168 = vst [vmem:[#allocation2 + $0x8] sm:$0xff] %v1152
    %1169 = vst [vmem:[#allocation2 + $0x10] sm:$0xff] %v1153
    %1170 = vst [vmem:[#allocation2 + $0x18] sm:$0xff] %v1154
    %1171 = vst [vmem:[#allocation2 + $0x20] sm:$0xff] %v1155
    %1172 = vst [vmem:[#allocation2 + $0x28] sm:$0xff] %v1156
    %1173 = vst [vmem:[#allocation2 + $0x30] sm:$0xff] %v1157
    %1174 = vst [vmem:[#allocation2 + $0x38] sm:$0xff] %v1158
    %1175 = vst [vmem:[#allocation2 + $0x40] sm:$0xff] %v1159
    %1176 = vst [vmem:[#allocation2 + $0x48] sm:$0xff] %v1160
    %1177 = vst [vmem:[#allocation2 + $0x50] sm:$0xff] %v1161
    %1178 = vst [vmem:[#allocation2 + $0x58] sm:$0xff] %v1162
    %1179 = vst [vmem:[#allocation2 + $0x60] sm:$0xff] %v1163
    %1180 = vst [vmem:[#allocation2 + $0x68] sm:$0xff] %v1164
    %1181 = vst [vmem:[#allocation2 + $0x70] sm:$0xff] %v1165
    %1182 = vst [vmem:[#allocation2 + $0x78] sm:$0xff] %v1166
    // Predicated region
    $region66: #{tpu_custom_call.1} parent=1 // pred_check
      %p1183 = pneg %p119
    $region67: #{tpu_custom_call.1} parent=1 // pred_check_branch
      %1185 = sbr.rel (%p1183) target = $region69
    $region68: #{tpu_custom_call.1} parent=1 // pred_region
      %v1186 = vld [vmem:[#allocation2] sm:$0xff]
      %v1187 = vld [vmem:[#allocation2 + $0x8] sm:$0xff]
      %v1188 = vld [vmem:[#allocation2 + $0x10] sm:$0xff]
      %v1189 = vld [vmem:[#allocation2 + $0x18] sm:$0xff]
      %v1190 = vld [vmem:[#allocation2 + $0x20] sm:$0xff]
      %v1191 = vld [vmem:[#allocation2 + $0x28] sm:$0xff]
      %v1192 = vld [vmem:[#allocation2 + $0x30] sm:$0xff]
      %v1193 = vld [vmem:[#allocation2 + $0x38] sm:$0xff]
      %v1194 = vld [vmem:[#allocation2 + $0x40] sm:$0xff]
      %v1195 = vld [vmem:[#allocation2 + $0x48] sm:$0xff]
      %v1196 = vld [vmem:[#allocation2 + $0x50] sm:$0xff]
      %v1197 = vld [vmem:[#allocation2 + $0x58] sm:$0xff]
      %v1198 = vld [vmem:[#allocation2 + $0x60] sm:$0xff]
      %v1199 = vld [vmem:[#allocation2 + $0x68] sm:$0xff]
      %v1200 = vld [vmem:[#allocation2 + $0x70] sm:$0xff]
      %v1201 = vld [vmem:[#allocation2 + $0x78] sm:$0xff]
      %v1202 = vld [vmem:[%s7] sm:$0x1]
      %v1204 = vperm.slane %v1202, 0
      %v1206 = vadd.f32 %v1186, %v1204
      %v1207 = vadd.f32 %v1187, %v1204
      %v1208 = vadd.f32 %v1188, %v1204
      %v1209 = vadd.f32 %v1189, %v1204
      %v1210 = vadd.f32 %v1190, %v1204
      %v1211 = vadd.f32 %v1191, %v1204
      %v1212 = vadd.f32 %v1192, %v1204
      %v1213 = vadd.f32 %v1193, %v1204
      %v1214 = vadd.f32 %v1194, %v1204
      %v1215 = vadd.f32 %v1195, %v1204
      %v1216 = vadd.f32 %v1196, %v1204
      %v1217 = vadd.f32 %v1197, %v1204
      %v1218 = vadd.f32 %v1198, %v1204
      %v1219 = vadd.f32 %v1199, %v1204
      %v1220 = vadd.f32 %v1200, %v1204
      %v1221 = vadd.f32 %v1201, %v1204
      %v1222 = vmax.f32 %v1206, 0.0
      %v1223 = vmax.f32 %v1207, 0.0
      %v1224 = vmax.f32 %v1208, 0.0
      %v1225 = vmax.f32 %v1209, 0.0
      %v1226 = vmax.f32 %v1210, 0.0
      %v1227 = vmax.f32 %v1211, 0.0
      %v1228 = vmax.f32 %v1212, 0.0
      %v1229 = vmax.f32 %v1213, 0.0
      %v1230 = vmax.f32 %v1214, 0.0
      %v1231 = vmax.f32 %v1215, 0.0
      %v1232 = vmax.f32 %v1216, 0.0
      %v1233 = vmax.f32 %v1217, 0.0
      %v1234 = vmax.f32 %v1218, 0.0
      %v1235 = vmax.f32 %v1219, 0.0
      %v1236 = vmax.f32 %v1220, 0.0
      %v1237 = vmax.f32 %v1221, 0.0
      %v1238 = vld [vmem:[#allocation11] sm:$0xff]
      %v1239 = vld [vmem:[#allocation11 + $0x8] sm:$0xff]
      %v1240 = vld [vmem:[#allocation11 + $0x10] sm:$0xff]
      %v1241 = vld [vmem:[#allocation11 + $0x18] sm:$0xff]
      %v1242 = vld [vmem:[#allocation11 + $0x20] sm:$0xff]
      %v1243 = vld [vmem:[#allocation11 + $0x28] sm:$0xff]
      %v1244 = vld [vmem:[#allocation11 + $0x30] sm:$0xff]
      %v1245 = vld [vmem:[#allocation11 + $0x38] sm:$0xff]
      %v1246 = vld [vmem:[#allocation11 + $0x40] sm:$0xff]
      %v1247 = vld [vmem:[#allocation11 + $0x48] sm:$0xff]
      %v1248 = vld [vmem:[#allocation11 + $0x50] sm:$0xff]
      %v1249 = vld [vmem:[#allocation11 + $0x58] sm:$0xff]
      %v1250 = vld [vmem:[#allocation11 + $0x60] sm:$0xff]
      %v1251 = vld [vmem:[#allocation11 + $0x68] sm:$0xff]
      %v1252 = vld [vmem:[#allocation11 + $0x70] sm:$0xff]
      %v1253 = vld [vmem:[#allocation11 + $0x78] sm:$0xff]
      %v1254 = vld [vmem:[%s9] sm:$0x1]
      %v1256 = vperm.slane %v1254, 0
      %1258 = vmatpush.msra.mxu0 %v1253
      %1259 = vmatpush.msra.mxu0 %v1252
      %1260 = vmatpush.msra.mxu0 %v1251
      %1261 = vmatpush.msra.mxu0 %v1250
      %1262 = vmatpush.msra.mxu0 %v1249
      %1263 = vmatpush.msra.mxu0 %v1248
      %1264 = vmatpush.msra.mxu0 %v1247
      %1265 = vmatpush.msra.mxu0 %v1246
      %1266 = vmatpush.msra.mxu0 %v1245
      %1267 = vmatpush.msra.mxu0 %v1244
      %1268 = vmatpush.msra.mxu0 %v1243
      %1269 = vmatpush.msra.mxu0 %v1242
      %1270 = vmatpush.msra.mxu0 %v1241
      %1271 = vmatpush.msra.mxu0 %v1240
      %1272 = vmatpush.msra.mxu0 %v1239
      %1273 = vmatpush.msra.mxu0 %v1238
      %1274 = vmatmul.f32.gmra.mxu0 %v1222
      %v1275 = vpop.f32.mrf.mxu0
      %v1276 = vadd.f32 %v1256, %v1275
      %1277 = vmatmul.f32.gmra.mxu0 %v1223
      %v1278 = vpop.f32.mrf.mxu0
      %v1279 = vadd.f32 %v1256, %v1278
      %1280 = vmatmul.f32.gmra.mxu0 %v1224
      %v1281 = vpop.f32.mrf.mxu0
      %v1282 = vadd.f32 %v1256, %v1281
      %1283 = vmatmul.f32.gmra.mxu0 %v1225
      %v1284 = vpop.f32.mrf.mxu0
      %v1285 = vadd.f32 %v1256, %v1284
      %1286 = vmatmul.f32.gmra.mxu0 %v1226
      %v1287 = vpop.f32.mrf.mxu0
      %v1288 = vadd.f32 %v1256, %v1287
      %1289 = vmatmul.f32.gmra.mxu0 %v1227
      %v1290 = vpop.f32.mrf.mxu0
      %v1291 = vadd.f32 %v1256, %v1290
      %1292 = vmatmul.f32.gmra.mxu0 %v1228
      %v1293 = vpop.f32.mrf.mxu0
      %v1294 = vadd.f32 %v1256, %v1293
      %1295 = vmatmul.f32.gmra.mxu0 %v1229
      %v1296 = vpop.f32.mrf.mxu0
      %v1297 = vadd.f32 %v1256, %v1296
      %1298 = vmatmul.f32.gmra.mxu0 %v1230
      %v1299 = vpop.f32.mrf.mxu0
      %v1300 = vadd.f32 %v1256, %v1299
      %1301 = vmatmul.f32.gmra.mxu0 %v1231
      %v1302 = vpop.f32.mrf.mxu0
      %v1303 = vadd.f32 %v1256, %v1302
      %1304 = vmatmul.f32.gmra.mxu0 %v1232
      %v1305 = vpop.f32.mrf.mxu0
      %v1306 = vadd.f32 %v1256, %v1305
      %1307 = vmatmul.f32.gmra.mxu0 %v1233
      %v1308 = vpop.f32.mrf.mxu0
      %v1309 = vadd.f32 %v1256, %v1308
      %1310 = vmatmul.f32.gmra.mxu0 %v1234
      %v1311 = vpop.f32.mrf.mxu0
      %v1312 = vadd.f32 %v1256, %v1311
      %1313 = vmatmul.f32.gmra.mxu0 %v1235
      %v1314 = vpop.f32.mrf.mxu0
      %v1315 = vadd.f32 %v1256, %v1314
      %1316 = vmatmul.f32.gmra.mxu0 %v1236
      %v1317 = vpop.f32.mrf.mxu0
      %v1318 = vadd.f32 %v1256, %v1317
      %1319 = vmatmul.f32.gmra.mxu0 %v1237
      %v1320 = vpop.f32.mrf.mxu0
      %v1321 = vadd.f32 %v1256, %v1320
      %1322 = vdwg.mxu0
      %v1323 = vmax.f32 %v1276, 0.0
      %v1324 = vmax.f32 %v1279, 0.0
      %v1325 = vmax.f32 %v1282, 0.0
      %v1326 = vmax.f32 %v1285, 0.0
      %v1327 = vmax.f32 %v1288, 0.0
      %v1328 = vmax.f32 %v1291, 0.0
      %v1329 = vmax.f32 %v1294, 0.0
      %v1330 = vmax.f32 %v1297, 0.0
      %v1331 = vmax.f32 %v1300, 0.0
      %v1332 = vmax.f32 %v1303, 0.0
      %v1333 = vmax.f32 %v1306, 0.0
      %v1334 = vmax.f32 %v1309, 0.0
      %v1335 = vmax.f32 %v1312, 0.0
      %v1336 = vmax.f32 %v1315, 0.0
      %v1337 = vmax.f32 %v1318, 0.0
      %v1338 = vmax.f32 %v1321, 0.0
      %1339 = vst [vmem:[#allocation15] sm:$0xff] %v1323
      %1340 = vst [vmem:[#allocation15 + $0x8] sm:$0xff] %v1324
      %1341 = vst [vmem:[#allocation15 + $0x10] sm:$0xff] %v1325
      %1342 = vst [vmem:[#allocation15 + $0x18] sm:$0xff] %v1326
      %1343 = vst [vmem:[#allocation15 + $0x20] sm:$0xff] %v1327
      %1344 = vst [vmem:[#allocation15 + $0x28] sm:$0xff] %v1328
      %1345 = vst [vmem:[#allocation15 + $0x30] sm:$0xff] %v1329
      %1346 = vst [vmem:[#allocation15 + $0x38] sm:$0xff] %v1330
      %1347 = vst [vmem:[#allocation15 + $0x40] sm:$0xff] %v1331
      %1348 = vst [vmem:[#allocation15 + $0x48] sm:$0xff] %v1332
      %1349 = vst [vmem:[#allocation15 + $0x50] sm:$0xff] %v1333
      %1350 = vst [vmem:[#allocation15 + $0x58] sm:$0xff] %v1334
      %1351 = vst [vmem:[#allocation15 + $0x60] sm:$0xff] %v1335
      %1352 = vst [vmem:[#allocation15 + $0x68] sm:$0xff] %v1336
      %1353 = vst [vmem:[#allocation15 + $0x70] sm:$0xff] %v1337
      %1354 = vst [vmem:[#allocation15 + $0x78] sm:$0xff] %v1338
    $region69: #{tpu_custom_call.1} parent=1 // pred_fallthru
      _
    // Predicated region
    $region70: #{tpu_custom_call.1} parent=1 // pred_check
      _
    $region71: #{tpu_custom_call.1} parent=1 // pred_check_branch
      %1356 = sbr.rel (0) target = $region73
    $region72: #{tpu_custom_call.1} parent=1 // pred_region
      %1358 = vsyncadd [#allocation5], 0
      %s1359 = sshll.u32 [#allocation12], 4
      %s1360 = int_to_ptr.vmem [resolvable:$true] %s1359
      %s1361 = sshll.u32 %s10, 4
      %s1362 = int_to_ptr.hbm [resolvable:$true] %s1361
      %1367 = dma.vmem_to_hbm [thread:$0]  %s1360, 2048, %s1362, [#allocation5], 64, 64, 4
    $region73: #{tpu_custom_call.1} parent=1 // pred_fallthru
      _
    // Predicated region
    $region74: #{tpu_custom_call.1} parent=1 // pred_check
      _
    $region75: #{tpu_custom_call.1} parent=1 // pred_check_branch
      %1369 = sbr.rel (0) target = $region77
    $region76: #{tpu_custom_call.1} parent=1 // pred_region
      _
    $region77: #{tpu_custom_call.1} parent=1 // pred_fallthru
      _
    // Predicated region
    $region78: #{tpu_custom_call.1} parent=1 // pred_check
      _
    $region79: #{tpu_custom_call.1} parent=1 // pred_check_branch
      %1371 = sbr.rel (0) target = $region81
    $region80: #{tpu_custom_call.1} parent=1 // pred_region
      %1373 = vsyncadd [#allocation14], 0
      %s1375 = sshll.u32 [#allocation13], 4
      %s1376 = int_to_ptr.vmem [resolvable:$true] %s1375
      %s1377 = sshll.u32 %s12, 4
      %s1378 = int_to_ptr.hbm [resolvable:$true] %s1377
      %1380 = dma.vmem_to_hbm [thread:$0]  %s1376, 32, %s1378, [#allocation14]
    $region81: #{tpu_custom_call.1} parent=1 // pred_fallthru
      _
    // Predicated region
    $region82: #{tpu_custom_call.1} parent=1 // pred_check
      _
    $region83: #{tpu_custom_call.1} parent=1 // pred_check_branch
      %1382 = sbr.rel (0) target = $region85
    $region84: #{tpu_custom_call.1} parent=1 // pred_region
      %1384 = vsyncadd [#allocation14], 0
      %s1385 = sshll.u32 [#allocation15], 4
      %s1386 = int_to_ptr.vmem [resolvable:$true] %s1385
      %s1387 = sshll.u32 %s13, 4
      %s1388 = int_to_ptr.hbm [resolvable:$true] %s1387
      %1393 = dma.vmem_to_hbm [thread:$0]  %s1386, 2048, %s1388, [#allocation14], 128, 128, 8
    $region85: #{tpu_custom_call.1} parent=1 // pred_fallthru
      _
    // Predicated region
    $region86: #{tpu_custom_call.1} parent=1 // pred_check
      _
    $region87: #{tpu_custom_call.1} parent=1 // pred_check_branch
      %1395 = sbr.rel (0) target = $region89
    $region88: #{tpu_custom_call.1} parent=1 // pred_region
      %1397 = dma.done [#allocation5], 2048
    $region89: #{tpu_custom_call.1} parent=1 // pred_fallthru
      _
    // Predicated region
    $region90: #{tpu_custom_call.1} parent=1 // pred_check
      _
    $region91: #{tpu_custom_call.1} parent=1 // pred_check_branch
      %1399 = sbr.rel (0) target = $region93
    $region92: #{tpu_custom_call.1} parent=1 // pred_region
      _
    $region93: #{tpu_custom_call.1} parent=1 // pred_fallthru
      _
    // Predicated region
    $region94: #{tpu_custom_call.1} parent=1 // pred_check
      _
    $region95: #{tpu_custom_call.1} parent=1 // pred_check_branch
      %1401 = sbr.rel (0) target = $region97
    $region96: #{tpu_custom_call.1} parent=1 // pred_region
      %1403 = dma.done [#allocation14], 32
    $region97: #{tpu_custom_call.1} parent=1 // pred_fallthru
      _
    // Predicated region
    $region98: #{tpu_custom_call.1} parent=1 // pred_check
      _
    $region99: #{tpu_custom_call.1} parent=1 // pred_check_branch
      %1405 = sbr.rel (0) target = $region101
    $region100: #{tpu_custom_call.1} parent=1 // pred_region
      %1407 = dma.done [#allocation14], 2048
    $region101: #{tpu_custom_call.1} parent=1 // pred_fallthru
      _
    %1408 = vsyncpa [#allocation4], 1
    %1409 = vsyncpa [#allocation7], 1
    %1410 = vsyncpa [#allocation10], 1
    %1411 = vsyncpa [#allocation5], 1
    %1412 = vsyncpa [#allocation14], 1

</llo_original>
